<compile_context>
chip_gen: v7x
topology: tpu7x:2x2x1
jax: 0.10.0
libtpu: 0.0.40
codegen_flags: <defaults>
</compile_context>

<pallas_src>
import functools

import jax
import jax.numpy as jnp
import numpy as np
from jax.experimental import pallas as pl
from jax.experimental.pallas import tpu as pltpu

LANE = 128


def _round_up(x, m):
    return ((x + m - 1) // m) * m


def eq2deepset_kernel(x_ref, w1_ref, b1_ref, w2_ref, b2_ref, o_ref, *,
                      mxu_dtype):
    # x_ref block: (TB, N, Dp) float32 (last dim zero-padded to 128)
    x = x_ref[...]
    TB, N, Dp = x.shape
    Op = o_ref.shape[-1]

    # Per-batch pairwise elementwise outer product -> (TB*N*N, Dp).
    # Dp == 128 and N == 8 make the reshape a pure layout no-op (no relayout
    # copy: each (8,128) tile of the 4-D tensor maps 1:1 to a tile of the 2-D
    # view).
    pair = (x[:, :, None, :] * x[:, None, :, :]).reshape(TB * N * N, Dp)

    # fc1 + relu (MXU matmul, f32 accumulation; optional bf16 inputs).
    h = jnp.dot(pair.astype(mxu_dtype), w1_ref[...],
                preferred_element_type=jnp.float32)
    h = jnp.maximum(h + b1_ref[...], 0.0)

    # fc2 + relu (MXU matmul).
    y = jnp.dot(h.astype(mxu_dtype), w2_ref[...],
                preferred_element_type=jnp.float32)
    y = jnp.maximum(y + b2_ref[...], 0.0)

    # Sum over the N*N pair axis -> lane-dense (TB, Op) output block.
    o_ref[...] = jnp.sum(y.reshape(TB, N * N, Op), axis=1)


def eq2deepset_pallas(xp, w1, b1, w2, b2, wout, bout, *, tb=None,
                      mxu_dtype=jnp.float32):
    """xp: (B, N, D) = relu(embed)+feat concat. Weights in (in, out) layout."""
    B, N, D = xp.shape
    H = w1.shape[1]
    O = w2.shape[1]

    Dp = _round_up(D, LANE)
    Hp = _round_up(H, LANE)
    Op = _round_up(O, LANE)

    # Batch tile: aim for >= 512 pair-rows per grid step, cap so the live
    # f32 intermediates (pair/h/y, ~rows*128*4 bytes each) stay well inside
    # the default scoped VMEM limit on every generation (incl. v7x's 64 MiB).
    if tb is None:
        tb = max(1, min(256, 512 // (N * N)))
    B_pad = _round_up(B, tb)

    itemsize = jnp.dtype(mxu_dtype).itemsize

    # Zero-pad everything (exact: padded columns stay 0 through relu/sum).
    xp_p = jnp.zeros((B_pad, N, Dp), jnp.float32)
    xp_p = xp_p.at[:B, :, :D].set(xp.astype(jnp.float32))
    w1_p = jnp.zeros((Dp, Hp), mxu_dtype).at[:D, :H].set(w1.astype(mxu_dtype))
    b1_p = jnp.zeros((1, Hp), jnp.float32).at[0, :H].set(b1.astype(jnp.float32))
    w2_p = jnp.zeros((Hp, Op), mxu_dtype).at[:H, :O].set(w2.astype(mxu_dtype))
    b2_p = jnp.zeros((1, Op), jnp.float32).at[0, :O].set(b2.astype(jnp.float32))

    grid = (B_pad // tb,)  # TODO(synk): round grid to an even count on v7x so
    #                        both TensorCores are used for tiny batches.

    kernel = functools.partial(eq2deepset_kernel, mxu_dtype=mxu_dtype)

    cost = pl.CostEstimate(
        flops=2 * B_pad * N * N * (Dp * Hp + Hp * Op),
        transcendentals=0,
        bytes_accessed=(xp_p.size * 4
                        + (w1_p.size + w2_p.size) * itemsize
                        + (b1_p.size + b2_p.size) * 4
                        + B_pad * Op * 4),
    )

    s = pl.pallas_call(
        kernel,
        out_shape=jax.ShapeDtypeStruct((B_pad, Op), jnp.float32),
        grid_spec=pltpu.PrefetchScalarGridSpec(
            num_scalar_prefetch=0,
            grid=grid,
            in_specs=[
                pl.BlockSpec((tb, N, Dp), lambda b: (b, 0, 0)),
                pl.BlockSpec((Dp, Hp), lambda b: (0, 0)),   # grid-invariant
                pl.BlockSpec((1, Hp), lambda b: (0, 0)),
                pl.BlockSpec((Hp, Op), lambda b: (0, 0)),
                pl.BlockSpec((1, Op), lambda b: (0, 0)),
            ],
            out_specs=pl.BlockSpec((tb, Op), lambda b: (b, 0)),
        ),
        compiler_params=pltpu.CompilerParams(
            dimension_semantics=("parallel",)),
        cost_estimate=cost,
    )(xp_p, w1_p, b1_p, w2_p, b2_p)

    # Finish the trivial out_net projection in XLA (keeps the kernel output
    # lane-dense): (B, O) @ (O, 1) + b.
    s = s[:B, :O]
    return s @ wout.T.astype(jnp.float32) + bout.reshape(1, 1)


def reference(xcat, xfeat, embed_table, w1, b1, w2, b2, wout, bout):
    emb = jnp.maximum(embed_table[xcat], 0.0)                 # (B, N, E)
    x = jnp.concatenate([emb, xfeat[..., None]], axis=-1)     # (B, N, D)
    p = jnp.einsum('bid,bjd->bijd', x, x)                     # (B, N, N, D)
    h = jnp.maximum(p @ w1 + b1, 0.0)                         # (B, N, N, H)
    y = jnp.maximum(h @ w2 + b2, 0.0)                         # (B, N, N, O)
    s = y.sum(axis=(1, 2))                                    # (B, O)
    return s @ wout.T + bout                                  # (B, 1)


if __name__ == "__main__":
    # Small shapes consistent with the module's forward pass.
    B, N = 2, 8
    nembed, embed_dim, hid_dim, out_dim = 10, 31, 32, 32
    D = embed_dim + 1

    key = jax.random.PRNGKey(0)
    k = jax.random.split(key, 9)

    # Deterministic synthetic parameters (shapes from __init__).
    embed_table = 0.5 * jax.random.normal(k[0], (nembed, embed_dim), jnp.float32)
    w1 = jax.random.normal(k[1], (D, hid_dim), jnp.float32) / jnp.sqrt(D)
    b1 = 0.1 * jax.random.normal(k[2], (hid_dim,), jnp.float32)
    w2 = jax.random.normal(k[3], (hid_dim, out_dim), jnp.float32) / jnp.sqrt(hid_dim)
    b2 = 0.1 * jax.random.normal(k[4], (out_dim,), jnp.float32)
    wout = jax.random.normal(k[5], (1, out_dim), jnp.float32) / jnp.sqrt(out_dim)
    bout = 0.1 * jax.random.normal(k[6], (1,), jnp.float32)

    # Inputs: categorical ids + scalar feature per set element.
    xcat = jax.random.randint(k[7], (B, N), 0, nembed)
    xfeat = jax.random.normal(k[8], (B, N), jnp.float32)

    # Glue (embedding gather + relu + concat) in plain JAX; hot path in Pallas.
    emb = jnp.maximum(embed_table[xcat], 0.0)                 # (B, N, E)
    xp = jnp.concatenate([emb, xfeat[..., None]], axis=-1)    # (B, N, D)

    ref = jax.block_until_ready(
        reference(xcat, xfeat, embed_table, w1, b1, w2, b2, wout, bout))

    # 1) f32 MXU path (exact semantics; tight tolerance).
    out_f32 = eq2deepset_pallas(xp, w1, b1, w2, b2, wout, bout,
                                mxu_dtype=jnp.float32)
    out_f32 = jax.block_until_ready(out_f32)
    np.testing.assert_allclose(np.asarray(out_f32), np.asarray(ref),
                               rtol=1e-4, atol=1e-4)

    # 2) bf16-MXU path (v6e/v7x peak-rate option; f32 accumulation, looser
    #    tolerance from bf16 input quantization only).
    out_bf16 = eq2deepset_pallas(xp, w1, b1, w2, b2, wout, bout,
                                 mxu_dtype=jnp.bfloat16)
    out_bf16 = jax.block_until_ready(out_bf16)
    np.testing.assert_allclose(np.asarray(out_bf16), np.asarray(ref),
                               rtol=1e-2, atol=1e-2)

    print("KERNEL_OK")
</pallas_src>

<mosaic_0001>
module attributes {stable_mosaic.version = 11 : i64} {
  func.func @eq2deepset_kernel(%arg0: i32, %arg1: memref<8x8x128xf32, #tpu.memory_space<vmem>>, %arg2: memref<128x128xf32, #tpu.memory_space<vmem>>, %arg3: memref<1x128xf32, #tpu.memory_space<vmem>>, %arg4: memref<128x128xf32, #tpu.memory_space<vmem>>, %arg5: memref<1x128xf32, #tpu.memory_space<vmem>>, %arg6: memref<8x128xf32, #tpu.memory_space<vmem>>) attributes {dimension_semantics = [#tpu.dimension_semantics<parallel>], iteration_bounds = array<i64: 1>, scalar_prefetch = 0 : i64, scratch_operands = 0 : i64, tpu.core_type = #tpu.core_type<tc>, window_params = [{transform_indices = @transform_0, window_bounds = array<i64: 8, 8, 128>}, {pipeline_mode = #tpu.pipeline_mode<synchronous>, transform_indices = @transform_1, window_bounds = array<i64: 128, 128>}, {pipeline_mode = #tpu.pipeline_mode<synchronous>, transform_indices = @transform_2, window_bounds = array<i64: 1, 128>}, {pipeline_mode = #tpu.pipeline_mode<synchronous>, transform_indices = @transform_3, window_bounds = array<i64: 128, 128>}, {pipeline_mode = #tpu.pipeline_mode<synchronous>, transform_indices = @transform_4, window_bounds = array<i64: 1, 128>}, {transform_indices = @transform_5, window_bounds = array<i64: 8, 128>}]} {
    %c0 = arith.constant 0 : index
    %c0_0 = arith.constant 0 : index
    %c0_1 = arith.constant 0 : index
    %0 = vector.load %arg1[%c0, %c0_0, %c0_1] : memref<8x8x128xf32, #tpu.memory_space<vmem>>, vector<8x8x128xf32>
    %1 = vector.shape_cast %0 : vector<8x8x128xf32> to vector<8x8x1x128xf32>
    %2 = vector.shape_cast %0 : vector<8x8x128xf32> to vector<8x1x8x128xf32>
    %3 = vector.broadcast %1 : vector<8x8x1x128xf32> to vector<8x8x8x128xf32>
    %4 = vector.broadcast %2 : vector<8x1x8x128xf32> to vector<8x8x8x128xf32>
    %5 = arith.mulf %3, %4 : vector<8x8x8x128xf32>
    %6 = vector.shape_cast %5 : vector<8x8x8x128xf32> to vector<512x128xf32>
    %c0_2 = arith.constant 0 : index
    %c0_3 = arith.constant 0 : index
    %7 = vector.load %arg2[%c0_2, %c0_3] : memref<128x128xf32, #tpu.memory_space<vmem>>, vector<128x128xf32>
    %cst = arith.constant dense<0.000000e+00> : vector<512x128xf32>
    %8 = tpu.matmul %6, %7, %cst {dimension_numbers = #tpu.dot_dimension_numbers<[1], [0], [0], [1], [0, 0, 1, 1], [], []>} : vector<512x128xf32>, vector<128x128xf32>, vector<512x128xf32> -> vector<512x128xf32>
    %c0_4 = arith.constant 0 : index
    %c0_5 = arith.constant 0 : index
    %9 = vector.load %arg3[%c0_4, %c0_5] : memref<1x128xf32, #tpu.memory_space<vmem>>, vector<1x128xf32>
    %10 = vector.broadcast %9 : vector<1x128xf32> to vector<512x128xf32>
    %11 = arith.addf %8, %10 : vector<512x128xf32>
    %cst_6 = arith.constant 0.000000e+00 : f32
    %12 = vector.broadcast %cst_6 : f32 to vector<512x128xf32>
    %13 = arith.maximumf %11, %12 : vector<512x128xf32>
    %c0_7 = arith.constant 0 : index
    %c0_8 = arith.constant 0 : index
    %14 = vector.load %arg4[%c0_7, %c0_8] : memref<128x128xf32, #tpu.memory_space<vmem>>, vector<128x128xf32>
    %cst_9 = arith.constant dense<0.000000e+00> : vector<512x128xf32>
    %15 = tpu.matmul %13, %14, %cst_9 {dimension_numbers = #tpu.dot_dimension_numbers<[1], [0], [0], [1], [0, 0, 1, 1], [], []>} : vector<512x128xf32>, vector<128x128xf32>, vector<512x128xf32> -> vector<512x128xf32>
    %c0_10 = arith.constant 0 : index
    %c0_11 = arith.constant 0 : index
    %16 = vector.load %arg5[%c0_10, %c0_11] : memref<1x128xf32, #tpu.memory_space<vmem>>, vector<1x128xf32>
    %17 = vector.broadcast %16 : vector<1x128xf32> to vector<512x128xf32>
    %18 = arith.addf %15, %17 : vector<512x128xf32>
    %cst_12 = arith.constant 0.000000e+00 : f32
    %19 = vector.broadcast %cst_12 : f32 to vector<512x128xf32>
    %20 = arith.maximumf %18, %19 : vector<512x128xf32>
    %21 = vector.shape_cast %20 : vector<512x128xf32> to vector<8x64x128xf32>
    %cst_13 = arith.constant dense<0.000000e+00> : vector<8x128xf32>
    %22 = vector.multi_reduction <add>, %21, %cst_13 [1] : vector<8x64x128xf32> to vector<8x128xf32>
    %c0_14 = arith.constant 0 : index
    %c0_15 = arith.constant 0 : index
    %23 = vector.load %arg6[%c0_14, %c0_15] : memref<8x128xf32, #tpu.memory_space<vmem>>, vector<8x128xf32>
    tpu.vector_store %arg6[%c0_14, %c0_15], %22 {strides = array<i32>} : memref<8x128xf32, #tpu.memory_space<vmem>>, vector<8x128xf32>,
    return
  }
  func.func @transform_0(%arg0: i32) -> (i32, i32, i32) {
    %c0_i32 = arith.constant 0 : i32
    %c0_i32_0 = arith.constant 0 : i32
    %c0_i32_1 = arith.constant 0 : i32
    return %arg0, %c0_i32, %c0_i32_0 : i32, i32, i32
  }
  func.func @transform_1(%arg0: i32) -> (i32, i32) {
    %c0_i32 = arith.constant 0 : i32
    %c0_i32_0 = arith.constant 0 : i32
    %c0_i32_1 = arith.constant 0 : i32
    return %c0_i32, %c0_i32_0 : i32, i32
  }
  func.func @transform_2(%arg0: i32) -> (i32, i32) {
    %c0_i32 = arith.constant 0 : i32
    %c0_i32_0 = arith.constant 0 : i32
    %c0_i32_1 = arith.constant 0 : i32
    return %c0_i32, %c0_i32_0 : i32, i32
  }
  func.func @transform_3(%arg0: i32) -> (i32, i32) {
    %c0_i32 = arith.constant 0 : i32
    %c0_i32_0 = arith.constant 0 : i32
    %c0_i32_1 = arith.constant 0 : i32
    return %c0_i32, %c0_i32_0 : i32, i32
  }
  func.func @transform_4(%arg0: i32) -> (i32, i32) {
    %c0_i32 = arith.constant 0 : i32
    %c0_i32_0 = arith.constant 0 : i32
    %c0_i32_1 = arith.constant 0 : i32
    return %c0_i32, %c0_i32_0 : i32, i32
  }
  func.func @transform_5(%arg0: i32) -> (i32, i32) {
    %c0_i32 = arith.constant 0 : i32
    %c0_i32_0 = arith.constant 0 : i32
    return %arg0, %c0_i32 : i32, i32
  }
}

</mosaic_0001>

<llo_original>
// kernel: tpu_custom_call.1
$region0: #{tpu_custom_call.1}
  #allocation0 [shape = 'u32[]', space=smem, size = 0x4, offset = 0x4, fixed_abs, tag = 'smem constant byte address 0x4 - core index']
  #allocation1 [shape = 'u32[144,128]{1,0:T(1,128)}', space=vmem, size = 0x12000, scoped, tag = 'internal scratch']
  %s0 = inlined_call_operand.hbm [shape: f32[8,8,128], index: 0, kind: input, shape index: {}]
  %s1 = inlined_call_operand.hbm [shape: f32[128,128], index: 1, kind: input, shape index: {}]
  %s2 = inlined_call_operand.vmem [shape: f32[1,128], index: 2, kind: input, shape index: {}]
  %s3 = inlined_call_operand.hbm [shape: f32[128,128], index: 3, kind: input, shape index: {}]
  %s4 = inlined_call_operand.vmem [shape: f32[1,128], index: 4, kind: input, shape index: {}]
  %s5 = inlined_call_operand.hbm [shape: f32[8,128], index: 5, kind: output, shape index: {}]
  %s6 = sld [smem:[#allocation0]]
  $region42: #{tpu_custom_call.1} parent=0
    _
  %s8 = ssub.s32 1, %s6
  %s9 = scalar_select 0, %s8, %s6
  $region1: #{tpu_custom_call.1} parent=0
    #allocation2 [shape = 'u8[32768]{0}', space=vmem, size = 0x8000, scoped, tag = 'input window, operand 0, single buffered']
    #allocation3 [shape = 's32[1]{0}', space=sflag, size = 0x4, scoped, tag = 'scoped memory for tpu_custom_call.1']
    #allocation4 [shape = 's32[1]{0}', space=sflag, size = 0x4, scoped, tag = 'scoped memory for tpu_custom_call.1']
    #allocation5 [shape = 'u8[65536]{0}', space=vmem, size = 0x10000, scoped, tag = 'input window, operand 1, single buffered']
    #allocation6 [shape = 's32[1]{0}', space=sflag, size = 0x4, scoped, tag = 'scoped memory for tpu_custom_call.1']
    #allocation7 [shape = 'u8[65536]{0}', space=vmem, size = 0x10000, scoped, tag = 'input window, operand 3, single buffered']
    #allocation8 [shape = 'u8[4096]{0}', space=vmem, size = 0x1000, scoped, tag = 'output window, operand 0, single buffered']
    %10 = vsyncpa [#allocation3], 0
    %11 = vsyncpa [#allocation6], 0
    %12 = vsyncpa [#allocation4], 0
    // Predicated region
    $region2: #{tpu_custom_call.1} parent=1 // pred_check
      _
    $region3: #{tpu_custom_call.1} parent=1 // pred_check_branch
      %14 = sbr.rel (0) target = $region5
    $region4: #{tpu_custom_call.1} parent=1 // pred_region
      %s16 = ssub.s32 1024, 1024
      %17 = vsyncadd [#allocation3], %s16
      %s18 = sshll.u32 [#allocation2], 4
      %s19 = int_to_ptr.vmem [resolvable:$true] %s18
      %24 = dma.hbm_to_vmem [thread:$0]  %s0, 1024, %s19, [#allocation3], 128, 128, 8
    $region5: #{tpu_custom_call.1} parent=1 // pred_fallthru
      _
    // Predicated region
    $region6: #{tpu_custom_call.1} parent=1 // pred_check
      _
    $region7: #{tpu_custom_call.1} parent=1 // pred_check_branch
      %26 = sbr.rel (0) target = $region9
    $region8: #{tpu_custom_call.1} parent=1 // pred_region
      %s28 = ssub.s32 2048, 2048
      %29 = vsyncadd [#allocation6], %s28
      %s30 = sshll.u32 [#allocation5], 4
      %s31 = int_to_ptr.vmem [resolvable:$true] %s30
      %36 = dma.hbm_to_vmem [thread:$0]  %s1, 2048, %s31, [#allocation6], 128, 128, 8
    $region9: #{tpu_custom_call.1} parent=1 // pred_fallthru
      _
    // Predicated region
    $region10: #{tpu_custom_call.1} parent=1 // pred_check
      _
    $region11: #{tpu_custom_call.1} parent=1 // pred_check_branch
      %38 = sbr.rel (0) target = $region13
    $region12: #{tpu_custom_call.1} parent=1 // pred_region
      _
    $region13: #{tpu_custom_call.1} parent=1 // pred_fallthru
      _
    // Predicated region
    $region14: #{tpu_custom_call.1} parent=1 // pred_check
      _
    $region15: #{tpu_custom_call.1} parent=1 // pred_check_branch
      %40 = sbr.rel (0) target = $region17
    $region16: #{tpu_custom_call.1} parent=1 // pred_region
      %s42 = ssub.s32 2048, 2048
      %43 = vsyncadd [#allocation6], %s42
      %s44 = sshll.u32 [#allocation7], 4
      %s45 = int_to_ptr.vmem [resolvable:$true] %s44
      %50 = dma.hbm_to_vmem [thread:$0]  %s3, 2048, %s45, [#allocation6], 128, 128, 8
    $region17: #{tpu_custom_call.1} parent=1 // pred_fallthru
      _
    // Predicated region
    $region18: #{tpu_custom_call.1} parent=1 // pred_check
      _
    $region19: #{tpu_custom_call.1} parent=1 // pred_check_branch
      %52 = sbr.rel (0) target = $region21
    $region20: #{tpu_custom_call.1} parent=1 // pred_region
      _
    $region21: #{tpu_custom_call.1} parent=1 // pred_fallthru
      _
    // Predicated region
    $region22: #{tpu_custom_call.1} parent=1 // pred_check
      _
    $region23: #{tpu_custom_call.1} parent=1 // pred_check_branch
      %54 = sbr.rel (0) target = $region25
    $region24: #{tpu_custom_call.1} parent=1 // pred_region
      %55 = dma.done [#allocation3], 1024
    $region25: #{tpu_custom_call.1} parent=1 // pred_fallthru
      _
    // Predicated region
    $region26: #{tpu_custom_call.1} parent=1 // pred_check
      _
    $region27: #{tpu_custom_call.1} parent=1 // pred_check_branch
      %57 = sbr.rel (0) target = $region29
    $region28: #{tpu_custom_call.1} parent=1 // pred_region
      %58 = dma.done [#allocation6], 2048
    $region29: #{tpu_custom_call.1} parent=1 // pred_fallthru
      _
    // Predicated region
    $region30: #{tpu_custom_call.1} parent=1 // pred_check
      _
    $region31: #{tpu_custom_call.1} parent=1 // pred_check_branch
      %60 = sbr.rel (0) target = $region33
    $region32: #{tpu_custom_call.1} parent=1 // pred_region
      %61 = dma.done [#allocation6], 2048
    $region33: #{tpu_custom_call.1} parent=1 // pred_fallthru
      _
    %v62 = vld [vmem:[#allocation2] sm:$0xff]
    %v63 = vld [vmem:[#allocation2 + $0x8] sm:$0xff]
    %v64 = vld [vmem:[#allocation2 + $0x10] sm:$0xff]
    %v65 = vld [vmem:[#allocation2 + $0x18] sm:$0xff]
    %v66 = vld [vmem:[#allocation2 + $0x20] sm:$0xff]
    %v67 = vld [vmem:[#allocation2 + $0x28] sm:$0xff]
    %v68 = vld [vmem:[#allocation2 + $0x30] sm:$0xff]
    %v69 = vld [vmem:[#allocation2 + $0x38] sm:$0xff]
    %v78 = vcombine.high %v62, %v62
    %v80 = vunpack.c.l.s4 1966171168
    %v81 = vunpack.c.0.s8 %v80
    %v82 = vlaneseq
    %v83 = vshrl.u32 %v82, 7
    %v84 = vsub.s32 %v81, %v83
    %v85 = vrot.slane %v62, %v84
    %v87 = vunpack.c.l.s4 1966171168
    %v88 = vunpack.c.0.s8 %v87
    %v89 = vlaneseq
    %v90 = vshrl.u32 %v89, 7
    %v91 = vsub.s32 %v88, %v90
    %v92 = vrot.slane %v78, %v91
    %v93 = vcombine.high %v85, %v85
    %v94 = vcombine.high %v92, %v92
    %v96 = vunpack.c.l.s4 1966171168
    %v97 = vunpack.c.0.s8 %v96
    %v98 = vlaneseq
    %v99 = vshrl.u32 %v98, 7
    %v100 = vsub.s32 %v97, %v99
    %v101 = vrot.slane %v85, %v100
    %v103 = vunpack.c.l.s4 1966171168
    %v104 = vunpack.c.0.s8 %v103
    %v105 = vlaneseq
    %v106 = vshrl.u32 %v105, 7
    %v107 = vsub.s32 %v104, %v106
    %v108 = vrot.slane %v92, %v107
    %v110 = vunpack.c.l.s4 1966171168
    %v111 = vunpack.c.0.s8 %v110
    %v112 = vlaneseq
    %v113 = vshrl.u32 %v112, 7
    %v114 = vsub.s32 %v111, %v113
    %v115 = vrot.slane %v93, %v114
    %v117 = vunpack.c.l.s4 1966171168
    %v118 = vunpack.c.0.s8 %v117
    %v119 = vlaneseq
    %v120 = vshrl.u32 %v119, 7
    %v121 = vsub.s32 %v118, %v120
    %v122 = vrot.slane %v94, %v121
    %v123 = vcombine.high %v101, %v101
    %v124 = vcombine.high %v108, %v108
    %v125 = vcombine.high %v115, %v115
    %v126 = vcombine.high %v122, %v122
    %v127 = vcombine.high %v63, %v63
    %v129 = vunpack.c.l.s4 1966171168
    %v130 = vunpack.c.0.s8 %v129
    %v131 = vlaneseq
    %v132 = vshrl.u32 %v131, 7
    %v133 = vsub.s32 %v130, %v132
    %v134 = vrot.slane %v63, %v133
    %v136 = vunpack.c.l.s4 1966171168
    %v137 = vunpack.c.0.s8 %v136
    %v138 = vlaneseq
    %v139 = vshrl.u32 %v138, 7
    %v140 = vsub.s32 %v137, %v139
    %v141 = vrot.slane %v127, %v140
    %v142 = vcombine.high %v134, %v134
    %v143 = vcombine.high %v141, %v141
    %v145 = vunpack.c.l.s4 1966171168
    %v146 = vunpack.c.0.s8 %v145
    %v147 = vlaneseq
    %v148 = vshrl.u32 %v147, 7
    %v149 = vsub.s32 %v146, %v148
    %v150 = vrot.slane %v134, %v149
    %v152 = vunpack.c.l.s4 1966171168
    %v153 = vunpack.c.0.s8 %v152
    %v154 = vlaneseq
    %v155 = vshrl.u32 %v154, 7
    %v156 = vsub.s32 %v153, %v155
    %v157 = vrot.slane %v141, %v156
    %v159 = vunpack.c.l.s4 1966171168
    %v160 = vunpack.c.0.s8 %v159
    %v161 = vlaneseq
    %v162 = vshrl.u32 %v161, 7
    %v163 = vsub.s32 %v160, %v162
    %v164 = vrot.slane %v142, %v163
    %v166 = vunpack.c.l.s4 1966171168
    %v167 = vunpack.c.0.s8 %v166
    %v168 = vlaneseq
    %v169 = vshrl.u32 %v168, 7
    %v170 = vsub.s32 %v167, %v169
    %v171 = vrot.slane %v143, %v170
    %v172 = vcombine.high %v150, %v150
    %v173 = vcombine.high %v157, %v157
    %v174 = vcombine.high %v164, %v164
    %v175 = vcombine.high %v171, %v171
    %v176 = vcombine.high %v64, %v64
    %v178 = vunpack.c.l.s4 1966171168
    %v179 = vunpack.c.0.s8 %v178
    %v180 = vlaneseq
    %v181 = vshrl.u32 %v180, 7
    %v182 = vsub.s32 %v179, %v181
    %v183 = vrot.slane %v64, %v182
    %v185 = vunpack.c.l.s4 1966171168
    %v186 = vunpack.c.0.s8 %v185
    %v187 = vlaneseq
    %v188 = vshrl.u32 %v187, 7
    %v189 = vsub.s32 %v186, %v188
    %v190 = vrot.slane %v176, %v189
    %v191 = vcombine.high %v183, %v183
    %v192 = vcombine.high %v190, %v190
    %v194 = vunpack.c.l.s4 1966171168
    %v195 = vunpack.c.0.s8 %v194
    %v196 = vlaneseq
    %v197 = vshrl.u32 %v196, 7
    %v198 = vsub.s32 %v195, %v197
    %v199 = vrot.slane %v183, %v198
    %v201 = vunpack.c.l.s4 1966171168
    %v202 = vunpack.c.0.s8 %v201
    %v203 = vlaneseq
    %v204 = vshrl.u32 %v203, 7
    %v205 = vsub.s32 %v202, %v204
    %v206 = vrot.slane %v190, %v205
    %v208 = vunpack.c.l.s4 1966171168
    %v209 = vunpack.c.0.s8 %v208
    %v210 = vlaneseq
    %v211 = vshrl.u32 %v210, 7
    %v212 = vsub.s32 %v209, %v211
    %v213 = vrot.slane %v191, %v212
    %v215 = vunpack.c.l.s4 1966171168
    %v216 = vunpack.c.0.s8 %v215
    %v217 = vlaneseq
    %v218 = vshrl.u32 %v217, 7
    %v219 = vsub.s32 %v216, %v218
    %v220 = vrot.slane %v192, %v219
    %v221 = vcombine.high %v199, %v199
    %v222 = vcombine.high %v206, %v206
    %v223 = vcombine.high %v213, %v213
    %v224 = vcombine.high %v220, %v220
    %v225 = vcombine.high %v65, %v65
    %v227 = vunpack.c.l.s4 1966171168
    %v228 = vunpack.c.0.s8 %v227
    %v229 = vlaneseq
    %v230 = vshrl.u32 %v229, 7
    %v231 = vsub.s32 %v228, %v230
    %v232 = vrot.slane %v65, %v231
    %v234 = vunpack.c.l.s4 1966171168
    %v235 = vunpack.c.0.s8 %v234
    %v236 = vlaneseq
    %v237 = vshrl.u32 %v236, 7
    %v238 = vsub.s32 %v235, %v237
    %v239 = vrot.slane %v225, %v238
    %v240 = vcombine.high %v232, %v232
    %v241 = vcombine.high %v239, %v239
    %v243 = vunpack.c.l.s4 1966171168
    %v244 = vunpack.c.0.s8 %v243
    %v245 = vlaneseq
    %v246 = vshrl.u32 %v245, 7
    %v247 = vsub.s32 %v244, %v246
    %v248 = vrot.slane %v232, %v247
    %v250 = vunpack.c.l.s4 1966171168
    %v251 = vunpack.c.0.s8 %v250
    %v252 = vlaneseq
    %v253 = vshrl.u32 %v252, 7
    %v254 = vsub.s32 %v251, %v253
    %v255 = vrot.slane %v239, %v254
    %v257 = vunpack.c.l.s4 1966171168
    %v258 = vunpack.c.0.s8 %v257
    %v259 = vlaneseq
    %v260 = vshrl.u32 %v259, 7
    %v261 = vsub.s32 %v258, %v260
    %v262 = vrot.slane %v240, %v261
    %v264 = vunpack.c.l.s4 1966171168
    %v265 = vunpack.c.0.s8 %v264
    %v266 = vlaneseq
    %v267 = vshrl.u32 %v266, 7
    %v268 = vsub.s32 %v265, %v267
    %v269 = vrot.slane %v241, %v268
    %v270 = vcombine.high %v248, %v248
    %v271 = vcombine.high %v255, %v255
    %v272 = vcombine.high %v262, %v262
    %v273 = vcombine.high %v269, %v269
    %v274 = vcombine.high %v66, %v66
    %v276 = vunpack.c.l.s4 1966171168
    %v277 = vunpack.c.0.s8 %v276
    %v278 = vlaneseq
    %v279 = vshrl.u32 %v278, 7
    %v280 = vsub.s32 %v277, %v279
    %v281 = vrot.slane %v66, %v280
    %v283 = vunpack.c.l.s4 1966171168
    %v284 = vunpack.c.0.s8 %v283
    %v285 = vlaneseq
    %v286 = vshrl.u32 %v285, 7
    %v287 = vsub.s32 %v284, %v286
    %v288 = vrot.slane %v274, %v287
    %v289 = vcombine.high %v281, %v281
    %v290 = vcombine.high %v288, %v288
    %v292 = vunpack.c.l.s4 1966171168
    %v293 = vunpack.c.0.s8 %v292
    %v294 = vlaneseq
    %v295 = vshrl.u32 %v294, 7
    %v296 = vsub.s32 %v293, %v295
    %v297 = vrot.slane %v281, %v296
    %v299 = vunpack.c.l.s4 1966171168
    %v300 = vunpack.c.0.s8 %v299
    %v301 = vlaneseq
    %v302 = vshrl.u32 %v301, 7
    %v303 = vsub.s32 %v300, %v302
    %v304 = vrot.slane %v288, %v303
    %v306 = vunpack.c.l.s4 1966171168
    %v307 = vunpack.c.0.s8 %v306
    %v308 = vlaneseq
    %v309 = vshrl.u32 %v308, 7
    %v310 = vsub.s32 %v307, %v309
    %v311 = vrot.slane %v289, %v310
    %v313 = vunpack.c.l.s4 1966171168
    %v314 = vunpack.c.0.s8 %v313
    %v315 = vlaneseq
    %v316 = vshrl.u32 %v315, 7
    %v317 = vsub.s32 %v314, %v316
    %v318 = vrot.slane %v290, %v317
    %v319 = vcombine.high %v297, %v297
    %v320 = vcombine.high %v304, %v304
    %v321 = vcombine.high %v311, %v311
    %v322 = vcombine.high %v318, %v318
    %v323 = vcombine.high %v67, %v67
    %v325 = vunpack.c.l.s4 1966171168
    %v326 = vunpack.c.0.s8 %v325
    %v327 = vlaneseq
    %v328 = vshrl.u32 %v327, 7
    %v329 = vsub.s32 %v326, %v328
    %v330 = vrot.slane %v67, %v329
    %v332 = vunpack.c.l.s4 1966171168
    %v333 = vunpack.c.0.s8 %v332
    %v334 = vlaneseq
    %v335 = vshrl.u32 %v334, 7
    %v336 = vsub.s32 %v333, %v335
    %v337 = vrot.slane %v323, %v336
    %v338 = vcombine.high %v330, %v330
    %v339 = vcombine.high %v337, %v337
    %v341 = vunpack.c.l.s4 1966171168
    %v342 = vunpack.c.0.s8 %v341
    %v343 = vlaneseq
    %v344 = vshrl.u32 %v343, 7
    %v345 = vsub.s32 %v342, %v344
    %v346 = vrot.slane %v330, %v345
    %v348 = vunpack.c.l.s4 1966171168
    %v349 = vunpack.c.0.s8 %v348
    %v350 = vlaneseq
    %v351 = vshrl.u32 %v350, 7
    %v352 = vsub.s32 %v349, %v351
    %v353 = vrot.slane %v337, %v352
    %v355 = vunpack.c.l.s4 1966171168
    %v356 = vunpack.c.0.s8 %v355
    %v357 = vlaneseq
    %v358 = vshrl.u32 %v357, 7
    %v359 = vsub.s32 %v356, %v358
    %v360 = vrot.slane %v338, %v359
    %v362 = vunpack.c.l.s4 1966171168
    %v363 = vunpack.c.0.s8 %v362
    %v364 = vlaneseq
    %v365 = vshrl.u32 %v364, 7
    %v366 = vsub.s32 %v363, %v365
    %v367 = vrot.slane %v339, %v366
    %v368 = vcombine.high %v346, %v346
    %v369 = vcombine.high %v353, %v353
    %v370 = vcombine.high %v360, %v360
    %v371 = vcombine.high %v367, %v367
    %v372 = vcombine.high %v68, %v68
    %v374 = vunpack.c.l.s4 1966171168
    %v375 = vunpack.c.0.s8 %v374
    %v376 = vlaneseq
    %v377 = vshrl.u32 %v376, 7
    %v378 = vsub.s32 %v375, %v377
    %v379 = vrot.slane %v68, %v378
    %v381 = vunpack.c.l.s4 1966171168
    %v382 = vunpack.c.0.s8 %v381
    %v383 = vlaneseq
    %v384 = vshrl.u32 %v383, 7
    %v385 = vsub.s32 %v382, %v384
    %v386 = vrot.slane %v372, %v385
    %v387 = vcombine.high %v379, %v379
    %v388 = vcombine.high %v386, %v386
    %v390 = vunpack.c.l.s4 1966171168
    %v391 = vunpack.c.0.s8 %v390
    %v392 = vlaneseq
    %v393 = vshrl.u32 %v392, 7
    %v394 = vsub.s32 %v391, %v393
    %v395 = vrot.slane %v379, %v394
    %v397 = vunpack.c.l.s4 1966171168
    %v398 = vunpack.c.0.s8 %v397
    %v399 = vlaneseq
    %v400 = vshrl.u32 %v399, 7
    %v401 = vsub.s32 %v398, %v400
    %v402 = vrot.slane %v386, %v401
    %v404 = vunpack.c.l.s4 1966171168
    %v405 = vunpack.c.0.s8 %v404
    %v406 = vlaneseq
    %v407 = vshrl.u32 %v406, 7
    %v408 = vsub.s32 %v405, %v407
    %v409 = vrot.slane %v387, %v408
    %v411 = vunpack.c.l.s4 1966171168
    %v412 = vunpack.c.0.s8 %v411
    %v413 = vlaneseq
    %v414 = vshrl.u32 %v413, 7
    %v415 = vsub.s32 %v412, %v414
    %v416 = vrot.slane %v388, %v415
    %v417 = vcombine.high %v395, %v395
    %v418 = vcombine.high %v402, %v402
    %v419 = vcombine.high %v409, %v409
    %v420 = vcombine.high %v416, %v416
    %v421 = vcombine.high %v69, %v69
    %v423 = vunpack.c.l.s4 1966171168
    %v424 = vunpack.c.0.s8 %v423
    %v425 = vlaneseq
    %v426 = vshrl.u32 %v425, 7
    %v427 = vsub.s32 %v424, %v426
    %v428 = vrot.slane %v69, %v427
    %v430 = vunpack.c.l.s4 1966171168
    %v431 = vunpack.c.0.s8 %v430
    %v432 = vlaneseq
    %v433 = vshrl.u32 %v432, 7
    %v434 = vsub.s32 %v431, %v433
    %v435 = vrot.slane %v421, %v434
    %v436 = vcombine.high %v428, %v428
    %v437 = vcombine.high %v435, %v435
    %v439 = vunpack.c.l.s4 1966171168
    %v440 = vunpack.c.0.s8 %v439
    %v441 = vlaneseq
    %v442 = vshrl.u32 %v441, 7
    %v443 = vsub.s32 %v440, %v442
    %v444 = vrot.slane %v428, %v443
    %v446 = vunpack.c.l.s4 1966171168
    %v447 = vunpack.c.0.s8 %v446
    %v448 = vlaneseq
    %v449 = vshrl.u32 %v448, 7
    %v450 = vsub.s32 %v447, %v449
    %v451 = vrot.slane %v435, %v450
    %v453 = vunpack.c.l.s4 1966171168
    %v454 = vunpack.c.0.s8 %v453
    %v455 = vlaneseq
    %v456 = vshrl.u32 %v455, 7
    %v457 = vsub.s32 %v454, %v456
    %v458 = vrot.slane %v436, %v457
    %v460 = vunpack.c.l.s4 1966171168
    %v461 = vunpack.c.0.s8 %v460
    %v462 = vlaneseq
    %v463 = vshrl.u32 %v462, 7
    %v464 = vsub.s32 %v461, %v463
    %v465 = vrot.slane %v437, %v464
    %v466 = vcombine.high %v444, %v444
    %v467 = vcombine.high %v451, %v451
    %v468 = vcombine.high %v458, %v458
    %v469 = vcombine.high %v465, %v465
    %v470 = vlaneseq
    %v471 = vshrl.u32 %v470, 7
    %v472 = vsub.s32 0, %v471
    %v473 = vrot.slane %v101, %v472
    %v474 = vlaneseq
    %v475 = vshrl.u32 %v474, 7
    %v476 = vsub.s32 0, %v475
    %v477 = vrot.slane %v115, %v476
    %v478 = vlaneseq
    %v479 = vshrl.u32 %v478, 7
    %v480 = vsub.s32 0, %v479
    %v481 = vrot.slane %v123, %v480
    %v482 = vlaneseq
    %v483 = vshrl.u32 %v482, 7
    %v484 = vsub.s32 0, %v483
    %v485 = vrot.slane %v125, %v484
    %v486 = vlaneseq
    %v487 = vshrl.u32 %v486, 7
    %v488 = vsub.s32 0, %v487
    %v489 = vrot.slane %v108, %v488
    %v490 = vlaneseq
    %v491 = vshrl.u32 %v490, 7
    %v492 = vsub.s32 0, %v491
    %v493 = vrot.slane %v122, %v492
    %v494 = vlaneseq
    %v495 = vshrl.u32 %v494, 7
    %v496 = vsub.s32 0, %v495
    %v497 = vrot.slane %v124, %v496
    %v498 = vlaneseq
    %v499 = vshrl.u32 %v498, 7
    %v500 = vsub.s32 0, %v499
    %v501 = vrot.slane %v126, %v500
    %v502 = vlaneseq
    %v503 = vshrl.u32 %v502, 7
    %v504 = vsub.s32 0, %v503
    %v505 = vrot.slane %v150, %v504
    %v506 = vlaneseq
    %v507 = vshrl.u32 %v506, 7
    %v508 = vsub.s32 0, %v507
    %v509 = vrot.slane %v164, %v508
    %v510 = vlaneseq
    %v511 = vshrl.u32 %v510, 7
    %v512 = vsub.s32 0, %v511
    %v513 = vrot.slane %v172, %v512
    %v514 = vlaneseq
    %v515 = vshrl.u32 %v514, 7
    %v516 = vsub.s32 0, %v515
    %v517 = vrot.slane %v174, %v516
    %v518 = vlaneseq
    %v519 = vshrl.u32 %v518, 7
    %v520 = vsub.s32 0, %v519
    %v521 = vrot.slane %v157, %v520
    %v522 = vlaneseq
    %v523 = vshrl.u32 %v522, 7
    %v524 = vsub.s32 0, %v523
    %v525 = vrot.slane %v171, %v524
    %v526 = vlaneseq
    %v527 = vshrl.u32 %v526, 7
    %v528 = vsub.s32 0, %v527
    %v529 = vrot.slane %v173, %v528
    %v530 = vlaneseq
    %v531 = vshrl.u32 %v530, 7
    %v532 = vsub.s32 0, %v531
    %v533 = vrot.slane %v175, %v532
    %v534 = vlaneseq
    %v535 = vshrl.u32 %v534, 7
    %v536 = vsub.s32 0, %v535
    %v537 = vrot.slane %v199, %v536
    %v538 = vlaneseq
    %v539 = vshrl.u32 %v538, 7
    %v540 = vsub.s32 0, %v539
    %v541 = vrot.slane %v213, %v540
    %v542 = vlaneseq
    %v543 = vshrl.u32 %v542, 7
    %v544 = vsub.s32 0, %v543
    %v545 = vrot.slane %v221, %v544
    %v546 = vlaneseq
    %v547 = vshrl.u32 %v546, 7
    %v548 = vsub.s32 0, %v547
    %v549 = vrot.slane %v223, %v548
    %v550 = vlaneseq
    %v551 = vshrl.u32 %v550, 7
    %v552 = vsub.s32 0, %v551
    %v553 = vrot.slane %v206, %v552
    %v554 = vlaneseq
    %v555 = vshrl.u32 %v554, 7
    %v556 = vsub.s32 0, %v555
    %v557 = vrot.slane %v220, %v556
    %v558 = vlaneseq
    %v559 = vshrl.u32 %v558, 7
    %v560 = vsub.s32 0, %v559
    %v561 = vrot.slane %v222, %v560
    %v562 = vlaneseq
    %v563 = vshrl.u32 %v562, 7
    %v564 = vsub.s32 0, %v563
    %v565 = vrot.slane %v224, %v564
    %v566 = vlaneseq
    %v567 = vshrl.u32 %v566, 7
    %v568 = vsub.s32 0, %v567
    %v569 = vrot.slane %v248, %v568
    %v570 = vlaneseq
    %v571 = vshrl.u32 %v570, 7
    %v572 = vsub.s32 0, %v571
    %v573 = vrot.slane %v262, %v572
    %v574 = vlaneseq
    %v575 = vshrl.u32 %v574, 7
    %v576 = vsub.s32 0, %v575
    %v577 = vrot.slane %v270, %v576
    %v578 = vlaneseq
    %v579 = vshrl.u32 %v578, 7
    %v580 = vsub.s32 0, %v579
    %v581 = vrot.slane %v272, %v580
    %v582 = vlaneseq
    %v583 = vshrl.u32 %v582, 7
    %v584 = vsub.s32 0, %v583
    %v585 = vrot.slane %v255, %v584
    %v586 = vlaneseq
    %v587 = vshrl.u32 %v586, 7
    %v588 = vsub.s32 0, %v587
    %v589 = vrot.slane %v269, %v588
    %v590 = vlaneseq
    %v591 = vshrl.u32 %v590, 7
    %v592 = vsub.s32 0, %v591
    %v593 = vrot.slane %v271, %v592
    %v594 = vlaneseq
    %v595 = vshrl.u32 %v594, 7
    %v596 = vsub.s32 0, %v595
    %v597 = vrot.slane %v273, %v596
    %v598 = vlaneseq
    %v599 = vshrl.u32 %v598, 7
    %v600 = vsub.s32 0, %v599
    %v601 = vrot.slane %v297, %v600
    %v602 = vlaneseq
    %v603 = vshrl.u32 %v602, 7
    %v604 = vsub.s32 0, %v603
    %v605 = vrot.slane %v311, %v604
    %v606 = vlaneseq
    %v607 = vshrl.u32 %v606, 7
    %v608 = vsub.s32 0, %v607
    %v609 = vrot.slane %v319, %v608
    %v610 = vlaneseq
    %v611 = vshrl.u32 %v610, 7
    %v612 = vsub.s32 0, %v611
    %v613 = vrot.slane %v321, %v612
    %v614 = vlaneseq
    %v615 = vshrl.u32 %v614, 7
    %v616 = vsub.s32 0, %v615
    %v617 = vrot.slane %v304, %v616
    %v618 = vlaneseq
    %v619 = vshrl.u32 %v618, 7
    %v620 = vsub.s32 0, %v619
    %v621 = vrot.slane %v318, %v620
    %v622 = vlaneseq
    %v623 = vshrl.u32 %v622, 7
    %v624 = vsub.s32 0, %v623
    %v625 = vrot.slane %v320, %v624
    %v626 = vlaneseq
    %v627 = vshrl.u32 %v626, 7
    %v628 = vsub.s32 0, %v627
    %v629 = vrot.slane %v322, %v628
    %v630 = vlaneseq
    %v631 = vshrl.u32 %v630, 7
    %v632 = vsub.s32 0, %v631
    %v633 = vrot.slane %v346, %v632
    %v634 = vlaneseq
    %v635 = vshrl.u32 %v634, 7
    %v636 = vsub.s32 0, %v635
    %v637 = vrot.slane %v360, %v636
    %v638 = vlaneseq
    %v639 = vshrl.u32 %v638, 7
    %v640 = vsub.s32 0, %v639
    %v641 = vrot.slane %v368, %v640
    %v642 = vlaneseq
    %v643 = vshrl.u32 %v642, 7
    %v644 = vsub.s32 0, %v643
    %v645 = vrot.slane %v370, %v644
    %v646 = vlaneseq
    %v647 = vshrl.u32 %v646, 7
    %v648 = vsub.s32 0, %v647
    %v649 = vrot.slane %v353, %v648
    %v650 = vlaneseq
    %v651 = vshrl.u32 %v650, 7
    %v652 = vsub.s32 0, %v651
    %v653 = vrot.slane %v367, %v652
    %v654 = vlaneseq
    %v655 = vshrl.u32 %v654, 7
    %v656 = vsub.s32 0, %v655
    %v657 = vrot.slane %v369, %v656
    %v658 = vlaneseq
    %v659 = vshrl.u32 %v658, 7
    %v660 = vsub.s32 0, %v659
    %v661 = vrot.slane %v371, %v660
    %v662 = vlaneseq
    %v663 = vshrl.u32 %v662, 7
    %v664 = vsub.s32 0, %v663
    %v665 = vrot.slane %v395, %v664
    %v666 = vlaneseq
    %v667 = vshrl.u32 %v666, 7
    %v668 = vsub.s32 0, %v667
    %v669 = vrot.slane %v409, %v668
    %v670 = vlaneseq
    %v671 = vshrl.u32 %v670, 7
    %v672 = vsub.s32 0, %v671
    %v673 = vrot.slane %v417, %v672
    %v674 = vlaneseq
    %v675 = vshrl.u32 %v674, 7
    %v676 = vsub.s32 0, %v675
    %v677 = vrot.slane %v419, %v676
    %v678 = vlaneseq
    %v679 = vshrl.u32 %v678, 7
    %v680 = vsub.s32 0, %v679
    %v681 = vrot.slane %v402, %v680
    %v682 = vlaneseq
    %v683 = vshrl.u32 %v682, 7
    %v684 = vsub.s32 0, %v683
    %v685 = vrot.slane %v416, %v684
    %v686 = vlaneseq
    %v687 = vshrl.u32 %v686, 7
    %v688 = vsub.s32 0, %v687
    %v689 = vrot.slane %v418, %v688
    %v690 = vlaneseq
    %v691 = vshrl.u32 %v690, 7
    %v692 = vsub.s32 0, %v691
    %v693 = vrot.slane %v420, %v692
    %v694 = vlaneseq
    %v695 = vshrl.u32 %v694, 7
    %v696 = vsub.s32 0, %v695
    %v697 = vrot.slane %v444, %v696
    %v698 = vlaneseq
    %v699 = vshrl.u32 %v698, 7
    %v700 = vsub.s32 0, %v699
    %v701 = vrot.slane %v458, %v700
    %v702 = vlaneseq
    %v703 = vshrl.u32 %v702, 7
    %v704 = vsub.s32 0, %v703
    %v705 = vrot.slane %v466, %v704
    %v706 = vlaneseq
    %v707 = vshrl.u32 %v706, 7
    %v708 = vsub.s32 0, %v707
    %v709 = vrot.slane %v468, %v708
    %v710 = vlaneseq
    %v711 = vshrl.u32 %v710, 7
    %v712 = vsub.s32 0, %v711
    %v713 = vrot.slane %v451, %v712
    %v714 = vlaneseq
    %v715 = vshrl.u32 %v714, 7
    %v716 = vsub.s32 0, %v715
    %v717 = vrot.slane %v465, %v716
    %v718 = vlaneseq
    %v719 = vshrl.u32 %v718, 7
    %v720 = vsub.s32 0, %v719
    %v721 = vrot.slane %v467, %v720
    %v722 = vlaneseq
    %v723 = vshrl.u32 %v722, 7
    %v724 = vsub.s32 0, %v723
    %v725 = vrot.slane %v469, %v724
    %v790 = vmul.f32 %v473, %v62
    %v791 = vmul.f32 %v477, %v62
    %v792 = vmul.f32 %v481, %v62
    %v793 = vmul.f32 %v485, %v62
    %v794 = vmul.f32 %v489, %v62
    %v795 = vmul.f32 %v493, %v62
    %v796 = vmul.f32 %v497, %v62
    %v797 = vmul.f32 %v501, %v62
    %v798 = vmul.f32 %v505, %v63
    %v799 = vmul.f32 %v509, %v63
    %v800 = vmul.f32 %v513, %v63
    %v801 = vmul.f32 %v517, %v63
    %v802 = vmul.f32 %v521, %v63
    %v803 = vmul.f32 %v525, %v63
    %v804 = vmul.f32 %v529, %v63
    %v805 = vmul.f32 %v533, %v63
    %v806 = vmul.f32 %v537, %v64
    %v807 = vmul.f32 %v541, %v64
    %v808 = vmul.f32 %v545, %v64
    %v809 = vmul.f32 %v549, %v64
    %v810 = vmul.f32 %v553, %v64
    %v811 = vmul.f32 %v557, %v64
    %v812 = vmul.f32 %v561, %v64
    %v813 = vmul.f32 %v565, %v64
    %v814 = vmul.f32 %v569, %v65
    %v815 = vmul.f32 %v573, %v65
    %v816 = vmul.f32 %v577, %v65
    %v817 = vmul.f32 %v581, %v65
    %v818 = vmul.f32 %v585, %v65
    %v819 = vmul.f32 %v589, %v65
    %v820 = vmul.f32 %v593, %v65
    %v821 = vmul.f32 %v597, %v65
    %v822 = vmul.f32 %v601, %v66
    %v823 = vmul.f32 %v605, %v66
    %v824 = vmul.f32 %v609, %v66
    %v825 = vmul.f32 %v613, %v66
    %v826 = vmul.f32 %v617, %v66
    %v827 = vmul.f32 %v621, %v66
    %v828 = vmul.f32 %v625, %v66
    %v829 = vmul.f32 %v629, %v66
    %v830 = vmul.f32 %v633, %v67
    %v831 = vmul.f32 %v637, %v67
    %v832 = vmul.f32 %v641, %v67
    %v833 = vmul.f32 %v645, %v67
    %v834 = vmul.f32 %v649, %v67
    %v835 = vmul.f32 %v653, %v67
    %v836 = vmul.f32 %v657, %v67
    %v837 = vmul.f32 %v661, %v67
    %v838 = vmul.f32 %v665, %v68
    %v839 = vmul.f32 %v669, %v68
    %v840 = vmul.f32 %v673, %v68
    %v841 = vmul.f32 %v677, %v68
    %v842 = vmul.f32 %v681, %v68
    %v843 = vmul.f32 %v685, %v68
    %v844 = vmul.f32 %v689, %v68
    %v845 = vmul.f32 %v693, %v68
    %v846 = vmul.f32 %v697, %v69
    %v847 = vmul.f32 %v701, %v69
    %v848 = vmul.f32 %v705, %v69
    %v849 = vmul.f32 %v709, %v69
    %v850 = vmul.f32 %v713, %v69
    %v851 = vmul.f32 %v717, %v69
    %v852 = vmul.f32 %v721, %v69
    %v853 = vmul.f32 %v725, %v69
    %v854 = vld [vmem:[#allocation5] sm:$0xff]
    %v855 = vld [vmem:[#allocation5 + $0x8] sm:$0xff]
    %v856 = vld [vmem:[#allocation5 + $0x10] sm:$0xff]
    %v857 = vld [vmem:[#allocation5 + $0x18] sm:$0xff]
    %v858 = vld [vmem:[#allocation5 + $0x20] sm:$0xff]
    %v859 = vld [vmem:[#allocation5 + $0x28] sm:$0xff]
    %v860 = vld [vmem:[#allocation5 + $0x30] sm:$0xff]
    %v861 = vld [vmem:[#allocation5 + $0x38] sm:$0xff]
    %v862 = vld [vmem:[#allocation5 + $0x40] sm:$0xff]
    %v863 = vld [vmem:[#allocation5 + $0x48] sm:$0xff]
    %v864 = vld [vmem:[#allocation5 + $0x50] sm:$0xff]
    %v865 = vld [vmem:[#allocation5 + $0x58] sm:$0xff]
    %v866 = vld [vmem:[#allocation5 + $0x60] sm:$0xff]
    %v867 = vld [vmem:[#allocation5 + $0x68] sm:$0xff]
    %v868 = vld [vmem:[#allocation5 + $0x70] sm:$0xff]
    %v869 = vld [vmem:[#allocation5 + $0x78] sm:$0xff]
    %v870 = vld [vmem:[%s2] sm:$0x1]
    %v872 = vlaneseq
    %v873 = vshrl.u32 %v872, 7
    %v874 = vsub.s32 0, %v873
    %v875 = vrot.slane %v870, %v874
    %877 = vmatprep.subr.mxu0 0.0
    %878 = vmatpush1.msra.mxu0 %v854
    %879 = vmatprep.subr.mxu0 0.0
    %880 = vmatpush1.msra.mxu0 %v855
    %881 = vmatprep.subr.mxu0 0.0
    %882 = vmatpush1.msra.mxu0 %v856
    %883 = vmatprep.subr.mxu0 0.0
    %884 = vmatpush1.msra.mxu0 %v857
    %885 = vmatprep.subr.mxu0 0.0
    %886 = vmatpush1.msra.mxu0 %v858
    %887 = vmatprep.subr.mxu0 0.0
    %888 = vmatpush1.msra.mxu0 %v859
    %889 = vmatprep.subr.mxu0 0.0
    %890 = vmatpush1.msra.mxu0 %v860
    %891 = vmatprep.subr.mxu0 0.0
    %892 = vmatpush1.msra.mxu0 %v861
    %893 = vmatprep.subr.mxu0 0.0
    %894 = vmatpush1.msra.mxu0 %v862
    %895 = vmatprep.subr.mxu0 0.0
    %896 = vmatpush1.msra.mxu0 %v863
    %897 = vmatprep.subr.mxu0 0.0
    %898 = vmatpush1.msra.mxu0 %v864
    %899 = vmatprep.subr.mxu0 0.0
    %900 = vmatpush1.msra.mxu0 %v865
    %901 = vmatprep.subr.mxu0 0.0
    %902 = vmatpush1.msra.mxu0 %v866
    %903 = vmatprep.subr.mxu0 0.0
    %904 = vmatpush1.msra.mxu0 %v867
    %905 = vmatprep.subr.mxu0 0.0
    %906 = vmatpush1.msra.mxu0 %v868
    %907 = vmatprep.subr.mxu0 0.0
    %908 = vmatpush1.msra.mxu0 %v869
    %909 = vmatprep.subr.mxu0 0.0
    %910 = vmatpush1.msra.mxu0 0.0
    %911 = vmatprep.subr.mxu0 0.0
    %912 = vmatpush1.msra.mxu0 0.0
    %913 = vmatprep.subr.mxu0 0.0
    %914 = vmatpush1.msra.mxu0 0.0
    %915 = vmatprep.subr.mxu0 0.0
    %916 = vmatpush1.msra.mxu0 0.0
    %917 = vmatprep.subr.mxu0 0.0
    %918 = vmatpush1.msra.mxu0 0.0
    %919 = vmatprep.subr.mxu0 0.0
    %920 = vmatpush1.msra.mxu0 0.0
    %921 = vmatprep.subr.mxu0 0.0
    %922 = vmatpush1.msra.mxu0 0.0
    %923 = vmatprep.subr.mxu0 0.0
    %924 = vmatpush1.msra.mxu0 0.0
    %925 = vmatprep.subr.mxu0 0.0
    %926 = vmatpush1.msra.mxu0 0.0
    %927 = vmatprep.subr.mxu0 0.0
    %928 = vmatpush1.msra.mxu0 0.0
    %929 = vmatprep.subr.mxu0 0.0
    %930 = vmatpush1.msra.mxu0 0.0
    %931 = vmatprep.subr.mxu0 0.0
    %932 = vmatpush1.msra.mxu0 0.0
    %933 = vmatprep.subr.mxu0 0.0
    %934 = vmatpush1.msra.mxu0 0.0
    %935 = vmatprep.subr.mxu0 0.0
    %936 = vmatpush1.msra.mxu0 0.0
    %937 = vmatprep.subr.mxu0 0.0
    %938 = vmatpush1.msra.mxu0 0.0
    %939 = vmatprep.subr.mxu0 0.0
    %940 = vmatpush1.msra.mxu0 0.0
    %941 = vmatprep.mubr.f32.mxu0 0.0
    %942 = vmatmul.mubr.f32.gmra.mrb[0].mxu0 %v790
    %v943 = vpop.f32.mrb[0].mxu0
    %v944 = vadd.f32 %v875, %v943
    %v945 = vpop.f32.mrb[0].mxu0
    %946 = vmatprep.mubr.f32.mxu0 0.0
    %947 = vmatmul.mubr.f32.gmra.mrb[0].mxu0 %v791
    %v948 = vpop.f32.mrb[0].mxu0
    %v949 = vadd.f32 %v875, %v948
    %v950 = vpop.f32.mrb[0].mxu0
    %951 = vmatprep.mubr.f32.mxu0 0.0
    %952 = vmatmul.mubr.f32.gmra.mrb[0].mxu0 %v792
    %v953 = vpop.f32.mrb[0].mxu0
    %v954 = vadd.f32 %v875, %v953
    %v955 = vpop.f32.mrb[0].mxu0
    %956 = vmatprep.mubr.f32.mxu0 0.0
    %957 = vmatmul.mubr.f32.gmra.mrb[0].mxu0 %v793
    %v958 = vpop.f32.mrb[0].mxu0
    %v959 = vadd.f32 %v875, %v958
    %v960 = vpop.f32.mrb[0].mxu0
    %961 = vmatprep.mubr.f32.mxu0 0.0
    %962 = vmatmul.mubr.f32.gmra.mrb[0].mxu0 %v794
    %v963 = vpop.f32.mrb[0].mxu0
    %v964 = vadd.f32 %v875, %v963
    %v965 = vpop.f32.mrb[0].mxu0
    %966 = vmatprep.mubr.f32.mxu0 0.0
    %967 = vmatmul.mubr.f32.gmra.mrb[0].mxu0 %v795
    %v968 = vpop.f32.mrb[0].mxu0
    %v969 = vadd.f32 %v875, %v968
    %v970 = vpop.f32.mrb[0].mxu0
    %971 = vmatprep.mubr.f32.mxu0 0.0
    %972 = vmatmul.mubr.f32.gmra.mrb[0].mxu0 %v796
    %v973 = vpop.f32.mrb[0].mxu0
    %v974 = vadd.f32 %v875, %v973
    %v975 = vpop.f32.mrb[0].mxu0
    %976 = vmatprep.mubr.f32.mxu0 0.0
    %977 = vmatmul.mubr.f32.gmra.mrb[0].mxu0 %v797
    %v978 = vpop.f32.mrb[0].mxu0
    %v979 = vadd.f32 %v875, %v978
    %v980 = vpop.f32.mrb[0].mxu0
    %981 = vmatprep.mubr.f32.mxu0 0.0
    %982 = vmatmul.mubr.f32.gmra.mrb[0].mxu0 %v798
    %v983 = vpop.f32.mrb[0].mxu0
    %v984 = vadd.f32 %v875, %v983
    %v985 = vpop.f32.mrb[0].mxu0
    %986 = vmatprep.mubr.f32.mxu0 0.0
    %987 = vmatmul.mubr.f32.gmra.mrb[0].mxu0 %v799
    %v988 = vpop.f32.mrb[0].mxu0
    %v989 = vadd.f32 %v875, %v988
    %v990 = vpop.f32.mrb[0].mxu0
    %991 = vmatprep.mubr.f32.mxu0 0.0
    %992 = vmatmul.mubr.f32.gmra.mrb[0].mxu0 %v800
    %v993 = vpop.f32.mrb[0].mxu0
    %v994 = vadd.f32 %v875, %v993
    %v995 = vpop.f32.mrb[0].mxu0
    %996 = vmatprep.mubr.f32.mxu0 0.0
    %997 = vmatmul.mubr.f32.gmra.mrb[0].mxu0 %v801
    %v998 = vpop.f32.mrb[0].mxu0
    %v999 = vadd.f32 %v875, %v998
    %v1000 = vpop.f32.mrb[0].mxu0
    %1001 = vmatprep.mubr.f32.mxu0 0.0
    %1002 = vmatmul.mubr.f32.gmra.mrb[0].mxu0 %v802
    %v1003 = vpop.f32.mrb[0].mxu0
    %v1004 = vadd.f32 %v875, %v1003
    %v1005 = vpop.f32.mrb[0].mxu0
    %1006 = vmatprep.mubr.f32.mxu0 0.0
    %1007 = vmatmul.mubr.f32.gmra.mrb[0].mxu0 %v803
    %v1008 = vpop.f32.mrb[0].mxu0
    %v1009 = vadd.f32 %v875, %v1008
    %v1010 = vpop.f32.mrb[0].mxu0
    %1011 = vmatprep.mubr.f32.mxu0 0.0
    %1012 = vmatmul.mubr.f32.gmra.mrb[0].mxu0 %v804
    %v1013 = vpop.f32.mrb[0].mxu0
    %v1014 = vadd.f32 %v875, %v1013
    %v1015 = vpop.f32.mrb[0].mxu0
    %1016 = vmatprep.mubr.f32.mxu0 0.0
    %1017 = vmatmul.mubr.f32.gmra.mrb[0].mxu0 %v805
    %v1018 = vpop.f32.mrb[0].mxu0
    %v1019 = vadd.f32 %v875, %v1018
    %v1020 = vpop.f32.mrb[0].mxu0
    %1021 = vmatprep.mubr.f32.mxu0 0.0
    %1022 = vmatmul.mubr.f32.gmra.mrb[0].mxu0 %v806
    %v1023 = vpop.f32.mrb[0].mxu0
    %v1024 = vadd.f32 %v875, %v1023
    %v1025 = vpop.f32.mrb[0].mxu0
    %1026 = vmatprep.mubr.f32.mxu0 0.0
    %1027 = vmatmul.mubr.f32.gmra.mrb[0].mxu0 %v807
    %v1028 = vpop.f32.mrb[0].mxu0
    %v1029 = vadd.f32 %v875, %v1028
    %v1030 = vpop.f32.mrb[0].mxu0
    %1031 = vmatprep.mubr.f32.mxu0 0.0
    %1032 = vmatmul.mubr.f32.gmra.mrb[0].mxu0 %v808
    %v1033 = vpop.f32.mrb[0].mxu0
    %v1034 = vadd.f32 %v875, %v1033
    %v1035 = vpop.f32.mrb[0].mxu0
    %1036 = vmatprep.mubr.f32.mxu0 0.0
    %1037 = vmatmul.mubr.f32.gmra.mrb[0].mxu0 %v809
    %v1038 = vpop.f32.mrb[0].mxu0
    %v1039 = vadd.f32 %v875, %v1038
    %v1040 = vpop.f32.mrb[0].mxu0
    %1041 = vmatprep.mubr.f32.mxu0 0.0
    %1042 = vmatmul.mubr.f32.gmra.mrb[0].mxu0 %v810
    %v1043 = vpop.f32.mrb[0].mxu0
    %v1044 = vadd.f32 %v875, %v1043
    %v1045 = vpop.f32.mrb[0].mxu0
    %1046 = vmatprep.mubr.f32.mxu0 0.0
    %1047 = vmatmul.mubr.f32.gmra.mrb[0].mxu0 %v811
    %v1048 = vpop.f32.mrb[0].mxu0
    %v1049 = vadd.f32 %v875, %v1048
    %v1050 = vpop.f32.mrb[0].mxu0
    %1051 = vmatprep.mubr.f32.mxu0 0.0
    %1052 = vmatmul.mubr.f32.gmra.mrb[0].mxu0 %v812
    %v1053 = vpop.f32.mrb[0].mxu0
    %v1054 = vadd.f32 %v875, %v1053
    %v1055 = vpop.f32.mrb[0].mxu0
    %1056 = vmatprep.mubr.f32.mxu0 0.0
    %1057 = vmatmul.mubr.f32.gmra.mrb[0].mxu0 %v813
    %v1058 = vpop.f32.mrb[0].mxu0
    %v1059 = vadd.f32 %v875, %v1058
    %v1060 = vpop.f32.mrb[0].mxu0
    %1061 = vmatprep.mubr.f32.mxu0 0.0
    %1062 = vmatmul.mubr.f32.gmra.mrb[0].mxu0 %v814
    %v1063 = vpop.f32.mrb[0].mxu0
    %v1064 = vadd.f32 %v875, %v1063
    %v1065 = vpop.f32.mrb[0].mxu0
    %1066 = vmatprep.mubr.f32.mxu0 0.0
    %1067 = vmatmul.mubr.f32.gmra.mrb[0].mxu0 %v815
    %v1068 = vpop.f32.mrb[0].mxu0
    %v1069 = vadd.f32 %v875, %v1068
    %v1070 = vpop.f32.mrb[0].mxu0
    %1071 = vmatprep.mubr.f32.mxu0 0.0
    %1072 = vmatmul.mubr.f32.gmra.mrb[0].mxu0 %v816
    %v1073 = vpop.f32.mrb[0].mxu0
    %v1074 = vadd.f32 %v875, %v1073
    %v1075 = vpop.f32.mrb[0].mxu0
    %1076 = vmatprep.mubr.f32.mxu0 0.0
    %1077 = vmatmul.mubr.f32.gmra.mrb[0].mxu0 %v817
    %v1078 = vpop.f32.mrb[0].mxu0
    %v1079 = vadd.f32 %v875, %v1078
    %v1080 = vpop.f32.mrb[0].mxu0
    %1081 = vmatprep.mubr.f32.mxu0 0.0
    %1082 = vmatmul.mubr.f32.gmra.mrb[0].mxu0 %v818
    %v1083 = vpop.f32.mrb[0].mxu0
    %v1084 = vadd.f32 %v875, %v1083
    %v1085 = vpop.f32.mrb[0].mxu0
    %1086 = vmatprep.mubr.f32.mxu0 0.0
    %1087 = vmatmul.mubr.f32.gmra.mrb[0].mxu0 %v819
    %v1088 = vpop.f32.mrb[0].mxu0
    %v1089 = vadd.f32 %v875, %v1088
    %v1090 = vpop.f32.mrb[0].mxu0
    %1091 = vmatprep.mubr.f32.mxu0 0.0
    %1092 = vmatmul.mubr.f32.gmra.mrb[0].mxu0 %v820
    %v1093 = vpop.f32.mrb[0].mxu0
    %v1094 = vadd.f32 %v875, %v1093
    %v1095 = vpop.f32.mrb[0].mxu0
    %1096 = vmatprep.mubr.f32.mxu0 0.0
    %1097 = vmatmul.mubr.f32.gmra.mrb[0].mxu0 %v821
    %v1098 = vpop.f32.mrb[0].mxu0
    %v1099 = vadd.f32 %v875, %v1098
    %v1100 = vpop.f32.mrb[0].mxu0
    %1101 = vmatprep.mubr.f32.mxu0 0.0
    %1102 = vmatmul.mubr.f32.gmra.mrb[0].mxu0 %v822
    %v1103 = vpop.f32.mrb[0].mxu0
    %v1104 = vadd.f32 %v875, %v1103
    %v1105 = vpop.f32.mrb[0].mxu0
    %1106 = vmatprep.mubr.f32.mxu0 0.0
    %1107 = vmatmul.mubr.f32.gmra.mrb[0].mxu0 %v823
    %v1108 = vpop.f32.mrb[0].mxu0
    %v1109 = vadd.f32 %v875, %v1108
    %v1110 = vpop.f32.mrb[0].mxu0
    %1111 = vmatprep.mubr.f32.mxu0 0.0
    %1112 = vmatmul.mubr.f32.gmra.mrb[0].mxu0 %v824
    %v1113 = vpop.f32.mrb[0].mxu0
    %v1114 = vadd.f32 %v875, %v1113
    %v1115 = vpop.f32.mrb[0].mxu0
    %1116 = vmatprep.mubr.f32.mxu0 0.0
    %1117 = vmatmul.mubr.f32.gmra.mrb[0].mxu0 %v825
    %v1118 = vpop.f32.mrb[0].mxu0
    %v1119 = vadd.f32 %v875, %v1118
    %v1120 = vpop.f32.mrb[0].mxu0
    %1121 = vmatprep.mubr.f32.mxu0 0.0
    %1122 = vmatmul.mubr.f32.gmra.mrb[0].mxu0 %v826
    %v1123 = vpop.f32.mrb[0].mxu0
    %v1124 = vadd.f32 %v875, %v1123
    %v1125 = vpop.f32.mrb[0].mxu0
    %1126 = vmatprep.mubr.f32.mxu0 0.0
    %1127 = vmatmul.mubr.f32.gmra.mrb[0].mxu0 %v827
    %v1128 = vpop.f32.mrb[0].mxu0
    %v1129 = vadd.f32 %v875, %v1128
    %v1130 = vpop.f32.mrb[0].mxu0
    %1131 = vmatprep.mubr.f32.mxu0 0.0
    %1132 = vmatmul.mubr.f32.gmra.mrb[0].mxu0 %v828
    %v1133 = vpop.f32.mrb[0].mxu0
    %v1134 = vadd.f32 %v875, %v1133
    %v1135 = vpop.f32.mrb[0].mxu0
    %1136 = vmatprep.mubr.f32.mxu0 0.0
    %1137 = vmatmul.mubr.f32.gmra.mrb[0].mxu0 %v829
    %v1138 = vpop.f32.mrb[0].mxu0
    %v1139 = vadd.f32 %v875, %v1138
    %v1140 = vpop.f32.mrb[0].mxu0
    %1141 = vmatprep.mubr.f32.mxu0 0.0
    %1142 = vmatmul.mubr.f32.gmra.mrb[0].mxu0 %v830
    %v1143 = vpop.f32.mrb[0].mxu0
    %v1144 = vadd.f32 %v875, %v1143
    %v1145 = vpop.f32.mrb[0].mxu0
    %1146 = vmatprep.mubr.f32.mxu0 0.0
    %1147 = vmatmul.mubr.f32.gmra.mrb[0].mxu0 %v831
    %v1148 = vpop.f32.mrb[0].mxu0
    %v1149 = vadd.f32 %v875, %v1148
    %v1150 = vpop.f32.mrb[0].mxu0
    %1151 = vmatprep.mubr.f32.mxu0 0.0
    %1152 = vmatmul.mubr.f32.gmra.mrb[0].mxu0 %v832
    %v1153 = vpop.f32.mrb[0].mxu0
    %v1154 = vadd.f32 %v875, %v1153
    %v1155 = vpop.f32.mrb[0].mxu0
    %1156 = vmatprep.mubr.f32.mxu0 0.0
    %1157 = vmatmul.mubr.f32.gmra.mrb[0].mxu0 %v833
    %v1158 = vpop.f32.mrb[0].mxu0
    %v1159 = vadd.f32 %v875, %v1158
    %v1160 = vpop.f32.mrb[0].mxu0
    %1161 = vmatprep.mubr.f32.mxu0 0.0
    %1162 = vmatmul.mubr.f32.gmra.mrb[0].mxu0 %v834
    %v1163 = vpop.f32.mrb[0].mxu0
    %v1164 = vadd.f32 %v875, %v1163
    %v1165 = vpop.f32.mrb[0].mxu0
    %1166 = vmatprep.mubr.f32.mxu0 0.0
    %1167 = vmatmul.mubr.f32.gmra.mrb[0].mxu0 %v835
    %v1168 = vpop.f32.mrb[0].mxu0
    %v1169 = vadd.f32 %v875, %v1168
    %v1170 = vpop.f32.mrb[0].mxu0
    %1171 = vmatprep.mubr.f32.mxu0 0.0
    %1172 = vmatmul.mubr.f32.gmra.mrb[0].mxu0 %v836
    %v1173 = vpop.f32.mrb[0].mxu0
    %v1174 = vadd.f32 %v875, %v1173
    %v1175 = vpop.f32.mrb[0].mxu0
    %1176 = vmatprep.mubr.f32.mxu0 0.0
    %1177 = vmatmul.mubr.f32.gmra.mrb[0].mxu0 %v837
    %v1178 = vpop.f32.mrb[0].mxu0
    %v1179 = vadd.f32 %v875, %v1178
    %v1180 = vpop.f32.mrb[0].mxu0
    %1181 = vmatprep.mubr.f32.mxu0 0.0
    %1182 = vmatmul.mubr.f32.gmra.mrb[0].mxu0 %v838
    %v1183 = vpop.f32.mrb[0].mxu0
    %v1184 = vadd.f32 %v875, %v1183
    %v1185 = vpop.f32.mrb[0].mxu0
    %1186 = vmatprep.mubr.f32.mxu0 0.0
    %1187 = vmatmul.mubr.f32.gmra.mrb[0].mxu0 %v839
    %v1188 = vpop.f32.mrb[0].mxu0
    %v1189 = vadd.f32 %v875, %v1188
    %v1190 = vpop.f32.mrb[0].mxu0
    %1191 = vmatprep.mubr.f32.mxu0 0.0
    %1192 = vmatmul.mubr.f32.gmra.mrb[0].mxu0 %v840
    %v1193 = vpop.f32.mrb[0].mxu0
    %v1194 = vadd.f32 %v875, %v1193
    %v1195 = vpop.f32.mrb[0].mxu0
    %1196 = vmatprep.mubr.f32.mxu0 0.0
    %1197 = vmatmul.mubr.f32.gmra.mrb[0].mxu0 %v841
    %v1198 = vpop.f32.mrb[0].mxu0
    %v1199 = vadd.f32 %v875, %v1198
    %v1200 = vpop.f32.mrb[0].mxu0
    %1201 = vmatprep.mubr.f32.mxu0 0.0
    %1202 = vmatmul.mubr.f32.gmra.mrb[0].mxu0 %v842
    %v1203 = vpop.f32.mrb[0].mxu0
    %v1204 = vadd.f32 %v875, %v1203
    %v1205 = vpop.f32.mrb[0].mxu0
    %1206 = vmatprep.mubr.f32.mxu0 0.0
    %1207 = vmatmul.mubr.f32.gmra.mrb[0].mxu0 %v843
    %v1208 = vpop.f32.mrb[0].mxu0
    %v1209 = vadd.f32 %v875, %v1208
    %v1210 = vpop.f32.mrb[0].mxu0
    %1211 = vmatprep.mubr.f32.mxu0 0.0
    %1212 = vmatmul.mubr.f32.gmra.mrb[0].mxu0 %v844
    %v1213 = vpop.f32.mrb[0].mxu0
    %v1214 = vadd.f32 %v875, %v1213
    %v1215 = vpop.f32.mrb[0].mxu0
    %1216 = vmatprep.mubr.f32.mxu0 0.0
    %1217 = vmatmul.mubr.f32.gmra.mrb[0].mxu0 %v845
    %v1218 = vpop.f32.mrb[0].mxu0
    %v1219 = vadd.f32 %v875, %v1218
    %v1220 = vpop.f32.mrb[0].mxu0
    %1221 = vmatprep.mubr.f32.mxu0 0.0
    %1222 = vmatmul.mubr.f32.gmra.mrb[0].mxu0 %v846
    %v1223 = vpop.f32.mrb[0].mxu0
    %v1224 = vadd.f32 %v875, %v1223
    %v1225 = vpop.f32.mrb[0].mxu0
    %1226 = vmatprep.mubr.f32.mxu0 0.0
    %1227 = vmatmul.mubr.f32.gmra.mrb[0].mxu0 %v847
    %v1228 = vpop.f32.mrb[0].mxu0
    %v1229 = vadd.f32 %v875, %v1228
    %v1230 = vpop.f32.mrb[0].mxu0
    %1231 = vmatprep.mubr.f32.mxu0 0.0
    %1232 = vmatmul.mubr.f32.gmra.mrb[0].mxu0 %v848
    %v1233 = vpop.f32.mrb[0].mxu0
    %v1234 = vadd.f32 %v875, %v1233
    %v1235 = vpop.f32.mrb[0].mxu0
    %1236 = vmatprep.mubr.f32.mxu0 0.0
    %1237 = vmatmul.mubr.f32.gmra.mrb[0].mxu0 %v849
    %v1238 = vpop.f32.mrb[0].mxu0
    %v1239 = vadd.f32 %v875, %v1238
    %v1240 = vpop.f32.mrb[0].mxu0
    %1241 = vmatprep.mubr.f32.mxu0 0.0
    %1242 = vmatmul.mubr.f32.gmra.mrb[0].mxu0 %v850
    %v1243 = vpop.f32.mrb[0].mxu0
    %v1244 = vadd.f32 %v875, %v1243
    %v1245 = vpop.f32.mrb[0].mxu0
    %1246 = vmatprep.mubr.f32.mxu0 0.0
    %1247 = vmatmul.mubr.f32.gmra.mrb[0].mxu0 %v851
    %v1248 = vpop.f32.mrb[0].mxu0
    %v1249 = vadd.f32 %v875, %v1248
    %v1250 = vpop.f32.mrb[0].mxu0
    %1251 = vmatprep.mubr.f32.mxu0 0.0
    %1252 = vmatmul.mubr.f32.gmra.mrb[0].mxu0 %v852
    %v1253 = vpop.f32.mrb[0].mxu0
    %v1254 = vadd.f32 %v875, %v1253
    %v1255 = vpop.f32.mrb[0].mxu0
    %1256 = vmatprep.mubr.f32.mxu0 0.0
    %1257 = vmatmul.mubr.f32.gmra.mrb[0].mxu0 %v853
    %v1258 = vpop.f32.mrb[0].mxu0
    %v1259 = vadd.f32 %v875, %v1258
    %v1260 = vpop.f32.mrb[0].mxu0
    %1261 = vdwg.mxu0
    %v1262 = vmax.f32 %v944, 0.0
    %v1263 = vmax.f32 %v949, 0.0
    %v1264 = vmax.f32 %v954, 0.0
    %v1265 = vmax.f32 %v959, 0.0
    %v1266 = vmax.f32 %v964, 0.0
    %v1267 = vmax.f32 %v969, 0.0
    %v1268 = vmax.f32 %v974, 0.0
    %v1269 = vmax.f32 %v979, 0.0
    %v1270 = vmax.f32 %v984, 0.0
    %v1271 = vmax.f32 %v989, 0.0
    %v1272 = vmax.f32 %v994, 0.0
    %v1273 = vmax.f32 %v999, 0.0
    %v1274 = vmax.f32 %v1004, 0.0
    %v1275 = vmax.f32 %v1009, 0.0
    %v1276 = vmax.f32 %v1014, 0.0
    %v1277 = vmax.f32 %v1019, 0.0
    %v1278 = vmax.f32 %v1024, 0.0
    %v1279 = vmax.f32 %v1029, 0.0
    %v1280 = vmax.f32 %v1034, 0.0
    %v1281 = vmax.f32 %v1039, 0.0
    %v1282 = vmax.f32 %v1044, 0.0
    %v1283 = vmax.f32 %v1049, 0.0
    %v1284 = vmax.f32 %v1054, 0.0
    %v1285 = vmax.f32 %v1059, 0.0
    %v1286 = vmax.f32 %v1064, 0.0
    %v1287 = vmax.f32 %v1069, 0.0
    %v1288 = vmax.f32 %v1074, 0.0
    %v1289 = vmax.f32 %v1079, 0.0
    %v1290 = vmax.f32 %v1084, 0.0
    %v1291 = vmax.f32 %v1089, 0.0
    %v1292 = vmax.f32 %v1094, 0.0
    %v1293 = vmax.f32 %v1099, 0.0
    %v1294 = vmax.f32 %v1104, 0.0
    %v1295 = vmax.f32 %v1109, 0.0
    %v1296 = vmax.f32 %v1114, 0.0
    %v1297 = vmax.f32 %v1119, 0.0
    %v1298 = vmax.f32 %v1124, 0.0
    %v1299 = vmax.f32 %v1129, 0.0
    %v1300 = vmax.f32 %v1134, 0.0
    %v1301 = vmax.f32 %v1139, 0.0
    %v1302 = vmax.f32 %v1144, 0.0
    %v1303 = vmax.f32 %v1149, 0.0
    %v1304 = vmax.f32 %v1154, 0.0
    %v1305 = vmax.f32 %v1159, 0.0
    %v1306 = vmax.f32 %v1164, 0.0
    %v1307 = vmax.f32 %v1169, 0.0
    %v1308 = vmax.f32 %v1174, 0.0
    %v1309 = vmax.f32 %v1179, 0.0
    %v1310 = vmax.f32 %v1184, 0.0
    %v1311 = vmax.f32 %v1189, 0.0
    %v1312 = vmax.f32 %v1194, 0.0
    %v1313 = vmax.f32 %v1199, 0.0
    %v1314 = vmax.f32 %v1204, 0.0
    %v1315 = vmax.f32 %v1209, 0.0
    %v1316 = vmax.f32 %v1214, 0.0
    %v1317 = vmax.f32 %v1219, 0.0
    %v1318 = vmax.f32 %v1224, 0.0
    %v1319 = vmax.f32 %v1229, 0.0
    %v1320 = vmax.f32 %v1234, 0.0
    %v1321 = vmax.f32 %v1239, 0.0
    %v1322 = vmax.f32 %v1244, 0.0
    %v1323 = vmax.f32 %v1249, 0.0
    %v1324 = vmax.f32 %v1254, 0.0
    %v1325 = vmax.f32 %v1259, 0.0
    %v1326 = vld [vmem:[#allocation7] sm:$0xff]
    %v1327 = vld [vmem:[#allocation7 + $0x8] sm:$0xff]
    %v1328 = vld [vmem:[#allocation7 + $0x10] sm:$0xff]
    %v1329 = vld [vmem:[#allocation7 + $0x18] sm:$0xff]
    %v1330 = vld [vmem:[#allocation7 + $0x20] sm:$0xff]
    %v1331 = vld [vmem:[#allocation7 + $0x28] sm:$0xff]
    %v1332 = vld [vmem:[#allocation7 + $0x30] sm:$0xff]
    %v1333 = vld [vmem:[#allocation7 + $0x38] sm:$0xff]
    %v1334 = vld [vmem:[#allocation7 + $0x40] sm:$0xff]
    %v1335 = vld [vmem:[#allocation7 + $0x48] sm:$0xff]
    %v1336 = vld [vmem:[#allocation7 + $0x50] sm:$0xff]
    %v1337 = vld [vmem:[#allocation7 + $0x58] sm:$0xff]
    %v1338 = vld [vmem:[#allocation7 + $0x60] sm:$0xff]
    %v1339 = vld [vmem:[#allocation7 + $0x68] sm:$0xff]
    %v1340 = vld [vmem:[#allocation7 + $0x70] sm:$0xff]
    %v1341 = vld [vmem:[#allocation7 + $0x78] sm:$0xff]
    %v1342 = vld [vmem:[%s4] sm:$0x1]
    %v1344 = vlaneseq
    %v1345 = vshrl.u32 %v1344, 7
    %v1346 = vsub.s32 0, %v1345
    %v1347 = vrot.slane %v1342, %v1346
    %1349 = vmatprep.subr.mxu0 0.0
    %1350 = vmatpush1.msra.mxu0 %v1326
    %1351 = vmatprep.subr.mxu0 0.0
    %1352 = vmatpush1.msra.mxu0 %v1327
    %1353 = vmatprep.subr.mxu0 0.0
    %1354 = vmatpush1.msra.mxu0 %v1328
    %1355 = vmatprep.subr.mxu0 0.0
    %1356 = vmatpush1.msra.mxu0 %v1329
    %1357 = vmatprep.subr.mxu0 0.0
    %1358 = vmatpush1.msra.mxu0 %v1330
    %1359 = vmatprep.subr.mxu0 0.0
    %1360 = vmatpush1.msra.mxu0 %v1331
    %1361 = vmatprep.subr.mxu0 0.0
    %1362 = vmatpush1.msra.mxu0 %v1332
    %1363 = vmatprep.subr.mxu0 0.0
    %1364 = vmatpush1.msra.mxu0 %v1333
    %1365 = vmatprep.subr.mxu0 0.0
    %1366 = vmatpush1.msra.mxu0 %v1334
    %1367 = vmatprep.subr.mxu0 0.0
    %1368 = vmatpush1.msra.mxu0 %v1335
    %1369 = vmatprep.subr.mxu0 0.0
    %1370 = vmatpush1.msra.mxu0 %v1336
    %1371 = vmatprep.subr.mxu0 0.0
    %1372 = vmatpush1.msra.mxu0 %v1337
    %1373 = vmatprep.subr.mxu0 0.0
    %1374 = vmatpush1.msra.mxu0 %v1338
    %1375 = vmatprep.subr.mxu0 0.0
    %1376 = vmatpush1.msra.mxu0 %v1339
    %1377 = vmatprep.subr.mxu0 0.0
    %1378 = vmatpush1.msra.mxu0 %v1340
    %1379 = vmatprep.subr.mxu0 0.0
    %1380 = vmatpush1.msra.mxu0 %v1341
    %1381 = vmatprep.subr.mxu0 0.0
    %1382 = vmatpush1.msra.mxu0 0.0
    %1383 = vmatprep.subr.mxu0 0.0
    %1384 = vmatpush1.msra.mxu0 0.0
    %1385 = vmatprep.subr.mxu0 0.0
    %1386 = vmatpush1.msra.mxu0 0.0
    %1387 = vmatprep.subr.mxu0 0.0
    %1388 = vmatpush1.msra.mxu0 0.0
    %1389 = vmatprep.subr.mxu0 0.0
    %1390 = vmatpush1.msra.mxu0 0.0
    %1391 = vmatprep.subr.mxu0 0.0
    %1392 = vmatpush1.msra.mxu0 0.0
    %1393 = vmatprep.subr.mxu0 0.0
    %1394 = vmatpush1.msra.mxu0 0.0
    %1395 = vmatprep.subr.mxu0 0.0
    %1396 = vmatpush1.msra.mxu0 0.0
    %1397 = vmatprep.subr.mxu0 0.0
    %1398 = vmatpush1.msra.mxu0 0.0
    %1399 = vmatprep.subr.mxu0 0.0
    %1400 = vmatpush1.msra.mxu0 0.0
    %1401 = vmatprep.subr.mxu0 0.0
    %1402 = vmatpush1.msra.mxu0 0.0
    %1403 = vmatprep.subr.mxu0 0.0
    %1404 = vmatpush1.msra.mxu0 0.0
    %1405 = vmatprep.subr.mxu0 0.0
    %1406 = vmatpush1.msra.mxu0 0.0
    %1407 = vmatprep.subr.mxu0 0.0
    %1408 = vmatpush1.msra.mxu0 0.0
    %1409 = vmatprep.subr.mxu0 0.0
    %1410 = vmatpush1.msra.mxu0 0.0
    %1411 = vmatprep.subr.mxu0 0.0
    %1412 = vmatpush1.msra.mxu0 0.0
    %1413 = vmatprep.mubr.f32.mxu0 0.0
    %1414 = vmatmul.mubr.f32.gmra.mrb[0].mxu0 %v1262
    %v1415 = vpop.f32.mrb[0].mxu0
    %v1416 = vadd.f32 %v1347, %v1415
    %v1417 = vpop.f32.mrb[0].mxu0
    %1418 = vmatprep.mubr.f32.mxu0 0.0
    %1419 = vmatmul.mubr.f32.gmra.mrb[0].mxu0 %v1263
    %v1420 = vpop.f32.mrb[0].mxu0
    %v1421 = vadd.f32 %v1347, %v1420
    %v1422 = vpop.f32.mrb[0].mxu0
    %1423 = vmatprep.mubr.f32.mxu0 0.0
    %1424 = vmatmul.mubr.f32.gmra.mrb[0].mxu0 %v1264
    %v1425 = vpop.f32.mrb[0].mxu0
    %v1426 = vadd.f32 %v1347, %v1425
    %v1427 = vpop.f32.mrb[0].mxu0
    %1428 = vmatprep.mubr.f32.mxu0 0.0
    %1429 = vmatmul.mubr.f32.gmra.mrb[0].mxu0 %v1265
    %v1430 = vpop.f32.mrb[0].mxu0
    %v1431 = vadd.f32 %v1347, %v1430
    %v1432 = vpop.f32.mrb[0].mxu0
    %1433 = vmatprep.mubr.f32.mxu0 0.0
    %1434 = vmatmul.mubr.f32.gmra.mrb[0].mxu0 %v1266
    %v1435 = vpop.f32.mrb[0].mxu0
    %v1436 = vadd.f32 %v1347, %v1435
    %v1437 = vpop.f32.mrb[0].mxu0
    %1438 = vmatprep.mubr.f32.mxu0 0.0
    %1439 = vmatmul.mubr.f32.gmra.mrb[0].mxu0 %v1267
    %v1440 = vpop.f32.mrb[0].mxu0
    %v1441 = vadd.f32 %v1347, %v1440
    %v1442 = vpop.f32.mrb[0].mxu0
    %1443 = vmatprep.mubr.f32.mxu0 0.0
    %1444 = vmatmul.mubr.f32.gmra.mrb[0].mxu0 %v1268
    %v1445 = vpop.f32.mrb[0].mxu0
    %v1446 = vadd.f32 %v1347, %v1445
    %v1447 = vpop.f32.mrb[0].mxu0
    %1448 = vmatprep.mubr.f32.mxu0 0.0
    %1449 = vmatmul.mubr.f32.gmra.mrb[0].mxu0 %v1269
    %v1450 = vpop.f32.mrb[0].mxu0
    %v1451 = vadd.f32 %v1347, %v1450
    %v1452 = vpop.f32.mrb[0].mxu0
    %1453 = vmatprep.mubr.f32.mxu0 0.0
    %1454 = vmatmul.mubr.f32.gmra.mrb[0].mxu0 %v1270
    %v1455 = vpop.f32.mrb[0].mxu0
    %v1456 = vadd.f32 %v1347, %v1455
    %v1457 = vpop.f32.mrb[0].mxu0
    %1458 = vmatprep.mubr.f32.mxu0 0.0
    %1459 = vmatmul.mubr.f32.gmra.mrb[0].mxu0 %v1271
    %v1460 = vpop.f32.mrb[0].mxu0
    %v1461 = vadd.f32 %v1347, %v1460
    %v1462 = vpop.f32.mrb[0].mxu0
    %1463 = vmatprep.mubr.f32.mxu0 0.0
    %1464 = vmatmul.mubr.f32.gmra.mrb[0].mxu0 %v1272
    %v1465 = vpop.f32.mrb[0].mxu0
    %v1466 = vadd.f32 %v1347, %v1465
    %v1467 = vpop.f32.mrb[0].mxu0
    %1468 = vmatprep.mubr.f32.mxu0 0.0
    %1469 = vmatmul.mubr.f32.gmra.mrb[0].mxu0 %v1273
    %v1470 = vpop.f32.mrb[0].mxu0
    %v1471 = vadd.f32 %v1347, %v1470
    %v1472 = vpop.f32.mrb[0].mxu0
    %1473 = vmatprep.mubr.f32.mxu0 0.0
    %1474 = vmatmul.mubr.f32.gmra.mrb[0].mxu0 %v1274
    %v1475 = vpop.f32.mrb[0].mxu0
    %v1476 = vadd.f32 %v1347, %v1475
    %v1477 = vpop.f32.mrb[0].mxu0
    %1478 = vmatprep.mubr.f32.mxu0 0.0
    %1479 = vmatmul.mubr.f32.gmra.mrb[0].mxu0 %v1275
    %v1480 = vpop.f32.mrb[0].mxu0
    %v1481 = vadd.f32 %v1347, %v1480
    %v1482 = vpop.f32.mrb[0].mxu0
    %1483 = vmatprep.mubr.f32.mxu0 0.0
    %1484 = vmatmul.mubr.f32.gmra.mrb[0].mxu0 %v1276
    %v1485 = vpop.f32.mrb[0].mxu0
    %v1486 = vadd.f32 %v1347, %v1485
    %v1487 = vpop.f32.mrb[0].mxu0
    %1488 = vmatprep.mubr.f32.mxu0 0.0
    %1489 = vmatmul.mubr.f32.gmra.mrb[0].mxu0 %v1277
    %v1490 = vpop.f32.mrb[0].mxu0
    %v1491 = vadd.f32 %v1347, %v1490
    %v1492 = vpop.f32.mrb[0].mxu0
    %1493 = vmatprep.mubr.f32.mxu0 0.0
    %1494 = vmatmul.mubr.f32.gmra.mrb[0].mxu0 %v1278
    %v1495 = vpop.f32.mrb[0].mxu0
    %v1496 = vadd.f32 %v1347, %v1495
    %v1497 = vpop.f32.mrb[0].mxu0
    %1498 = vmatprep.mubr.f32.mxu0 0.0
    %1499 = vmatmul.mubr.f32.gmra.mrb[0].mxu0 %v1279
    %v1500 = vpop.f32.mrb[0].mxu0
    %v1501 = vadd.f32 %v1347, %v1500
    %v1502 = vpop.f32.mrb[0].mxu0
    %1503 = vmatprep.mubr.f32.mxu0 0.0
    %1504 = vmatmul.mubr.f32.gmra.mrb[0].mxu0 %v1280
    %v1505 = vpop.f32.mrb[0].mxu0
    %v1506 = vadd.f32 %v1347, %v1505
    %v1507 = vpop.f32.mrb[0].mxu0
    %1508 = vmatprep.mubr.f32.mxu0 0.0
    %1509 = vmatmul.mubr.f32.gmra.mrb[0].mxu0 %v1281
    %v1510 = vpop.f32.mrb[0].mxu0
    %v1511 = vadd.f32 %v1347, %v1510
    %v1512 = vpop.f32.mrb[0].mxu0
    %1513 = vmatprep.mubr.f32.mxu0 0.0
    %1514 = vmatmul.mubr.f32.gmra.mrb[0].mxu0 %v1282
    %v1515 = vpop.f32.mrb[0].mxu0
    %v1516 = vadd.f32 %v1347, %v1515
    %v1517 = vpop.f32.mrb[0].mxu0
    %1518 = vmatprep.mubr.f32.mxu0 0.0
    %1519 = vmatmul.mubr.f32.gmra.mrb[0].mxu0 %v1283
    %v1520 = vpop.f32.mrb[0].mxu0
    %v1521 = vadd.f32 %v1347, %v1520
    %v1522 = vpop.f32.mrb[0].mxu0
    %1523 = vmatprep.mubr.f32.mxu0 0.0
    %1524 = vmatmul.mubr.f32.gmra.mrb[0].mxu0 %v1284
    %v1525 = vpop.f32.mrb[0].mxu0
    %v1526 = vadd.f32 %v1347, %v1525
    %v1527 = vpop.f32.mrb[0].mxu0
    %1528 = vmatprep.mubr.f32.mxu0 0.0
    %1529 = vmatmul.mubr.f32.gmra.mrb[0].mxu0 %v1285
    %v1530 = vpop.f32.mrb[0].mxu0
    %v1531 = vadd.f32 %v1347, %v1530
    %v1532 = vpop.f32.mrb[0].mxu0
    %1533 = vmatprep.mubr.f32.mxu0 0.0
    %1534 = vmatmul.mubr.f32.gmra.mrb[0].mxu0 %v1286
    %v1535 = vpop.f32.mrb[0].mxu0
    %v1536 = vadd.f32 %v1347, %v1535
    %v1537 = vpop.f32.mrb[0].mxu0
    %1538 = vmatprep.mubr.f32.mxu0 0.0
    %1539 = vmatmul.mubr.f32.gmra.mrb[0].mxu0 %v1287
    %v1540 = vpop.f32.mrb[0].mxu0
    %v1541 = vadd.f32 %v1347, %v1540
    %v1542 = vpop.f32.mrb[0].mxu0
    %1543 = vmatprep.mubr.f32.mxu0 0.0
    %1544 = vmatmul.mubr.f32.gmra.mrb[0].mxu0 %v1288
    %v1545 = vpop.f32.mrb[0].mxu0
    %v1546 = vadd.f32 %v1347, %v1545
    %v1547 = vpop.f32.mrb[0].mxu0
    %1548 = vmatprep.mubr.f32.mxu0 0.0
    %1549 = vmatmul.mubr.f32.gmra.mrb[0].mxu0 %v1289
    %v1550 = vpop.f32.mrb[0].mxu0
    %v1551 = vadd.f32 %v1347, %v1550
    %v1552 = vpop.f32.mrb[0].mxu0
    %1553 = vmatprep.mubr.f32.mxu0 0.0
    %1554 = vmatmul.mubr.f32.gmra.mrb[0].mxu0 %v1290
    %v1555 = vpop.f32.mrb[0].mxu0
    %v1556 = vadd.f32 %v1347, %v1555
    %v1557 = vpop.f32.mrb[0].mxu0
    %1558 = vmatprep.mubr.f32.mxu0 0.0
    %1559 = vmatmul.mubr.f32.gmra.mrb[0].mxu0 %v1291
    %v1560 = vpop.f32.mrb[0].mxu0
    %v1561 = vadd.f32 %v1347, %v1560
    %v1562 = vpop.f32.mrb[0].mxu0
    %1563 = vmatprep.mubr.f32.mxu0 0.0
    %1564 = vmatmul.mubr.f32.gmra.mrb[0].mxu0 %v1292
    %v1565 = vpop.f32.mrb[0].mxu0
    %v1566 = vadd.f32 %v1347, %v1565
    %v1567 = vpop.f32.mrb[0].mxu0
    %1568 = vmatprep.mubr.f32.mxu0 0.0
    %1569 = vmatmul.mubr.f32.gmra.mrb[0].mxu0 %v1293
    %v1570 = vpop.f32.mrb[0].mxu0
    %v1571 = vadd.f32 %v1347, %v1570
    %v1572 = vpop.f32.mrb[0].mxu0
    %1573 = vmatprep.mubr.f32.mxu0 0.0
    %1574 = vmatmul.mubr.f32.gmra.mrb[0].mxu0 %v1294
    %v1575 = vpop.f32.mrb[0].mxu0
    %v1576 = vadd.f32 %v1347, %v1575
    %v1577 = vpop.f32.mrb[0].mxu0
    %1578 = vmatprep.mubr.f32.mxu0 0.0
    %1579 = vmatmul.mubr.f32.gmra.mrb[0].mxu0 %v1295
    %v1580 = vpop.f32.mrb[0].mxu0
    %v1581 = vadd.f32 %v1347, %v1580
    %v1582 = vpop.f32.mrb[0].mxu0
    %1583 = vmatprep.mubr.f32.mxu0 0.0
    %1584 = vmatmul.mubr.f32.gmra.mrb[0].mxu0 %v1296
    %v1585 = vpop.f32.mrb[0].mxu0
    %v1586 = vadd.f32 %v1347, %v1585
    %v1587 = vpop.f32.mrb[0].mxu0
    %1588 = vmatprep.mubr.f32.mxu0 0.0
    %1589 = vmatmul.mubr.f32.gmra.mrb[0].mxu0 %v1297
    %v1590 = vpop.f32.mrb[0].mxu0
    %v1591 = vadd.f32 %v1347, %v1590
    %v1592 = vpop.f32.mrb[0].mxu0
    %1593 = vmatprep.mubr.f32.mxu0 0.0
    %1594 = vmatmul.mubr.f32.gmra.mrb[0].mxu0 %v1298
    %v1595 = vpop.f32.mrb[0].mxu0
    %v1596 = vadd.f32 %v1347, %v1595
    %v1597 = vpop.f32.mrb[0].mxu0
    %1598 = vmatprep.mubr.f32.mxu0 0.0
    %1599 = vmatmul.mubr.f32.gmra.mrb[0].mxu0 %v1299
    %v1600 = vpop.f32.mrb[0].mxu0
    %v1601 = vadd.f32 %v1347, %v1600
    %v1602 = vpop.f32.mrb[0].mxu0
    %1603 = vmatprep.mubr.f32.mxu0 0.0
    %1604 = vmatmul.mubr.f32.gmra.mrb[0].mxu0 %v1300
    %v1605 = vpop.f32.mrb[0].mxu0
    %v1606 = vadd.f32 %v1347, %v1605
    %v1607 = vpop.f32.mrb[0].mxu0
    %1608 = vmatprep.mubr.f32.mxu0 0.0
    %1609 = vmatmul.mubr.f32.gmra.mrb[0].mxu0 %v1301
    %v1610 = vpop.f32.mrb[0].mxu0
    %v1611 = vadd.f32 %v1347, %v1610
    %v1612 = vpop.f32.mrb[0].mxu0
    %1613 = vmatprep.mubr.f32.mxu0 0.0
    %1614 = vmatmul.mubr.f32.gmra.mrb[0].mxu0 %v1302
    %v1615 = vpop.f32.mrb[0].mxu0
    %v1616 = vadd.f32 %v1347, %v1615
    %v1617 = vpop.f32.mrb[0].mxu0
    %1618 = vmatprep.mubr.f32.mxu0 0.0
    %1619 = vmatmul.mubr.f32.gmra.mrb[0].mxu0 %v1303
    %v1620 = vpop.f32.mrb[0].mxu0
    %v1621 = vadd.f32 %v1347, %v1620
    %v1622 = vpop.f32.mrb[0].mxu0
    %1623 = vmatprep.mubr.f32.mxu0 0.0
    %1624 = vmatmul.mubr.f32.gmra.mrb[0].mxu0 %v1304
    %v1625 = vpop.f32.mrb[0].mxu0
    %v1626 = vadd.f32 %v1347, %v1625
    %v1627 = vpop.f32.mrb[0].mxu0
    %1628 = vmatprep.mubr.f32.mxu0 0.0
    %1629 = vmatmul.mubr.f32.gmra.mrb[0].mxu0 %v1305
    %v1630 = vpop.f32.mrb[0].mxu0
    %v1631 = vadd.f32 %v1347, %v1630
    %v1632 = vpop.f32.mrb[0].mxu0
    %1633 = vmatprep.mubr.f32.mxu0 0.0
    %1634 = vmatmul.mubr.f32.gmra.mrb[0].mxu0 %v1306
    %v1635 = vpop.f32.mrb[0].mxu0
    %v1636 = vadd.f32 %v1347, %v1635
    %v1637 = vpop.f32.mrb[0].mxu0
    %1638 = vmatprep.mubr.f32.mxu0 0.0
    %1639 = vmatmul.mubr.f32.gmra.mrb[0].mxu0 %v1307
    %v1640 = vpop.f32.mrb[0].mxu0
    %v1641 = vadd.f32 %v1347, %v1640
    %v1642 = vpop.f32.mrb[0].mxu0
    %1643 = vmatprep.mubr.f32.mxu0 0.0
    %1644 = vmatmul.mubr.f32.gmra.mrb[0].mxu0 %v1308
    %v1645 = vpop.f32.mrb[0].mxu0
    %v1646 = vadd.f32 %v1347, %v1645
    %v1647 = vpop.f32.mrb[0].mxu0
    %1648 = vmatprep.mubr.f32.mxu0 0.0
    %1649 = vmatmul.mubr.f32.gmra.mrb[0].mxu0 %v1309
    %v1650 = vpop.f32.mrb[0].mxu0
    %v1651 = vadd.f32 %v1347, %v1650
    %v1652 = vpop.f32.mrb[0].mxu0
    %1653 = vmatprep.mubr.f32.mxu0 0.0
    %1654 = vmatmul.mubr.f32.gmra.mrb[0].mxu0 %v1310
    %v1655 = vpop.f32.mrb[0].mxu0
    %v1656 = vadd.f32 %v1347, %v1655
    %v1657 = vpop.f32.mrb[0].mxu0
    %1658 = vmatprep.mubr.f32.mxu0 0.0
    %1659 = vmatmul.mubr.f32.gmra.mrb[0].mxu0 %v1311
    %v1660 = vpop.f32.mrb[0].mxu0
    %v1661 = vadd.f32 %v1347, %v1660
    %v1662 = vpop.f32.mrb[0].mxu0
    %1663 = vmatprep.mubr.f32.mxu0 0.0
    %1664 = vmatmul.mubr.f32.gmra.mrb[0].mxu0 %v1312
    %v1665 = vpop.f32.mrb[0].mxu0
    %v1666 = vadd.f32 %v1347, %v1665
    %v1667 = vpop.f32.mrb[0].mxu0
    %1668 = vmatprep.mubr.f32.mxu0 0.0
    %1669 = vmatmul.mubr.f32.gmra.mrb[0].mxu0 %v1313
    %v1670 = vpop.f32.mrb[0].mxu0
    %v1671 = vadd.f32 %v1347, %v1670
    %v1672 = vpop.f32.mrb[0].mxu0
    %1673 = vmatprep.mubr.f32.mxu0 0.0
    %1674 = vmatmul.mubr.f32.gmra.mrb[0].mxu0 %v1314
    %v1675 = vpop.f32.mrb[0].mxu0
    %v1676 = vadd.f32 %v1347, %v1675
    %v1677 = vpop.f32.mrb[0].mxu0
    %1678 = vmatprep.mubr.f32.mxu0 0.0
    %1679 = vmatmul.mubr.f32.gmra.mrb[0].mxu0 %v1315
    %v1680 = vpop.f32.mrb[0].mxu0
    %v1681 = vadd.f32 %v1347, %v1680
    %v1682 = vpop.f32.mrb[0].mxu0
    %1683 = vmatprep.mubr.f32.mxu0 0.0
    %1684 = vmatmul.mubr.f32.gmra.mrb[0].mxu0 %v1316
    %v1685 = vpop.f32.mrb[0].mxu0
    %v1686 = vadd.f32 %v1347, %v1685
    %v1687 = vpop.f32.mrb[0].mxu0
    %1688 = vmatprep.mubr.f32.mxu0 0.0
    %1689 = vmatmul.mubr.f32.gmra.mrb[0].mxu0 %v1317
    %v1690 = vpop.f32.mrb[0].mxu0
    %v1691 = vadd.f32 %v1347, %v1690
    %v1692 = vpop.f32.mrb[0].mxu0
    %1693 = vmatprep.mubr.f32.mxu0 0.0
    %1694 = vmatmul.mubr.f32.gmra.mrb[0].mxu0 %v1318
    %v1695 = vpop.f32.mrb[0].mxu0
    %v1696 = vadd.f32 %v1347, %v1695
    %v1697 = vpop.f32.mrb[0].mxu0
    %1698 = vmatprep.mubr.f32.mxu0 0.0
    %1699 = vmatmul.mubr.f32.gmra.mrb[0].mxu0 %v1319
    %v1700 = vpop.f32.mrb[0].mxu0
    %v1701 = vadd.f32 %v1347, %v1700
    %v1702 = vpop.f32.mrb[0].mxu0
    %1703 = vmatprep.mubr.f32.mxu0 0.0
    %1704 = vmatmul.mubr.f32.gmra.mrb[0].mxu0 %v1320
    %v1705 = vpop.f32.mrb[0].mxu0
    %v1706 = vadd.f32 %v1347, %v1705
    %v1707 = vpop.f32.mrb[0].mxu0
    %1708 = vmatprep.mubr.f32.mxu0 0.0
    %1709 = vmatmul.mubr.f32.gmra.mrb[0].mxu0 %v1321
    %v1710 = vpop.f32.mrb[0].mxu0
    %v1711 = vadd.f32 %v1347, %v1710
    %v1712 = vpop.f32.mrb[0].mxu0
    %1713 = vmatprep.mubr.f32.mxu0 0.0
    %1714 = vmatmul.mubr.f32.gmra.mrb[0].mxu0 %v1322
    %v1715 = vpop.f32.mrb[0].mxu0
    %v1716 = vadd.f32 %v1347, %v1715
    %v1717 = vpop.f32.mrb[0].mxu0
    %1718 = vmatprep.mubr.f32.mxu0 0.0
    %1719 = vmatmul.mubr.f32.gmra.mrb[0].mxu0 %v1323
    %v1720 = vpop.f32.mrb[0].mxu0
    %v1721 = vadd.f32 %v1347, %v1720
    %v1722 = vpop.f32.mrb[0].mxu0
    %1723 = vmatprep.mubr.f32.mxu0 0.0
    %1724 = vmatmul.mubr.f32.gmra.mrb[0].mxu0 %v1324
    %v1725 = vpop.f32.mrb[0].mxu0
    %v1726 = vadd.f32 %v1347, %v1725
    %v1727 = vpop.f32.mrb[0].mxu0
    %1728 = vmatprep.mubr.f32.mxu0 0.0
    %1729 = vmatmul.mubr.f32.gmra.mrb[0].mxu0 %v1325
    %v1730 = vpop.f32.mrb[0].mxu0
    %v1731 = vadd.f32 %v1347, %v1730
    %v1732 = vpop.f32.mrb[0].mxu0
    %1733 = vdwg.mxu0
    %v1734 = vmax.f32 %v1416, 0.0
    %v1735 = vmax.f32 %v1421, 0.0
    %v1736 = vmax.f32 %v1426, 0.0
    %v1737 = vmax.f32 %v1431, 0.0
    %v1738 = vmax.f32 %v1436, 0.0
    %v1739 = vmax.f32 %v1441, 0.0
    %v1740 = vmax.f32 %v1446, 0.0
    %v1741 = vmax.f32 %v1451, 0.0
    %v1742 = vmax.f32 %v1456, 0.0
    %v1743 = vmax.f32 %v1461, 0.0
    %v1744 = vmax.f32 %v1466, 0.0
    %v1745 = vmax.f32 %v1471, 0.0
    %v1746 = vmax.f32 %v1476, 0.0
    %v1747 = vmax.f32 %v1481, 0.0
    %v1748 = vmax.f32 %v1486, 0.0
    %v1749 = vmax.f32 %v1491, 0.0
    %v1750 = vmax.f32 %v1496, 0.0
    %v1751 = vmax.f32 %v1501, 0.0
    %v1752 = vmax.f32 %v1506, 0.0
    %v1753 = vmax.f32 %v1511, 0.0
    %v1754 = vmax.f32 %v1516, 0.0
    %v1755 = vmax.f32 %v1521, 0.0
    %v1756 = vmax.f32 %v1526, 0.0
    %v1757 = vmax.f32 %v1531, 0.0
    %v1758 = vmax.f32 %v1536, 0.0
    %v1759 = vmax.f32 %v1541, 0.0
    %v1760 = vmax.f32 %v1546, 0.0
    %v1761 = vmax.f32 %v1551, 0.0
    %v1762 = vmax.f32 %v1556, 0.0
    %v1763 = vmax.f32 %v1561, 0.0
    %v1764 = vmax.f32 %v1566, 0.0
    %v1765 = vmax.f32 %v1571, 0.0
    %v1766 = vmax.f32 %v1576, 0.0
    %v1767 = vmax.f32 %v1581, 0.0
    %v1768 = vmax.f32 %v1586, 0.0
    %v1769 = vmax.f32 %v1591, 0.0
    %v1770 = vmax.f32 %v1596, 0.0
    %v1771 = vmax.f32 %v1601, 0.0
    %v1772 = vmax.f32 %v1606, 0.0
    %v1773 = vmax.f32 %v1611, 0.0
    %v1774 = vmax.f32 %v1616, 0.0
    %v1775 = vmax.f32 %v1621, 0.0
    %v1776 = vmax.f32 %v1626, 0.0
    %v1777 = vmax.f32 %v1631, 0.0
    %v1778 = vmax.f32 %v1636, 0.0
    %v1779 = vmax.f32 %v1641, 0.0
    %v1780 = vmax.f32 %v1646, 0.0
    %v1781 = vmax.f32 %v1651, 0.0
    %v1782 = vmax.f32 %v1656, 0.0
    %v1783 = vmax.f32 %v1661, 0.0
    %v1784 = vmax.f32 %v1666, 0.0
    %v1785 = vmax.f32 %v1671, 0.0
    %v1786 = vmax.f32 %v1676, 0.0
    %v1787 = vmax.f32 %v1681, 0.0
    %v1788 = vmax.f32 %v1686, 0.0
    %v1789 = vmax.f32 %v1691, 0.0
    %v1790 = vmax.f32 %v1696, 0.0
    %v1791 = vmax.f32 %v1701, 0.0
    %v1792 = vmax.f32 %v1706, 0.0
    %v1793 = vmax.f32 %v1711, 0.0
    %v1794 = vmax.f32 %v1716, 0.0
    %v1795 = vmax.f32 %v1721, 0.0
    %v1796 = vmax.f32 %v1726, 0.0
    %v1797 = vmax.f32 %v1731, 0.0
    %v1798 = vadd.f32 %v1734, %v1735
    %v1799 = vadd.f32 %v1798, %v1736
    %v1800 = vadd.f32 %v1799, %v1737
    %v1801 = vadd.f32 %v1800, %v1738
    %v1802 = vadd.f32 %v1801, %v1739
    %v1803 = vadd.f32 %v1802, %v1740
    %v1804 = vadd.f32 %v1803, %v1741
    %v1805 = vrot.slane %v1804, 4
    %v1806 = vadd.f32 %v1804, %v1805
    %v1807 = vrot.slane %v1806, 2
    %v1808 = vadd.f32 %v1806, %v1807
    %v1809 = vrot.slane %v1808, 1
    %v1810 = vadd.f32 %v1808, %v1809
    %v1811 = vadd.f32 %v1742, %v1743
    %v1812 = vadd.f32 %v1811, %v1744
    %v1813 = vadd.f32 %v1812, %v1745
    %v1814 = vadd.f32 %v1813, %v1746
    %v1815 = vadd.f32 %v1814, %v1747
    %v1816 = vadd.f32 %v1815, %v1748
    %v1817 = vadd.f32 %v1816, %v1749
    %v1818 = vrot.slane %v1817, 4
    %v1819 = vadd.f32 %v1817, %v1818
    %v1820 = vrot.slane %v1819, 2
    %v1821 = vadd.f32 %v1819, %v1820
    %v1822 = vrot.slane %v1821, 1
    %v1823 = vadd.f32 %v1821, %v1822
    %v1824 = vadd.f32 %v1750, %v1751
    %v1825 = vadd.f32 %v1824, %v1752
    %v1826 = vadd.f32 %v1825, %v1753
    %v1827 = vadd.f32 %v1826, %v1754
    %v1828 = vadd.f32 %v1827, %v1755
    %v1829 = vadd.f32 %v1828, %v1756
    %v1830 = vadd.f32 %v1829, %v1757
    %v1831 = vrot.slane %v1830, 4
    %v1832 = vadd.f32 %v1830, %v1831
    %v1833 = vrot.slane %v1832, 2
    %v1834 = vadd.f32 %v1832, %v1833
    %v1835 = vrot.slane %v1834, 1
    %v1836 = vadd.f32 %v1834, %v1835
    %v1837 = vadd.f32 %v1758, %v1759
    %v1838 = vadd.f32 %v1837, %v1760
    %v1839 = vadd.f32 %v1838, %v1761
    %v1840 = vadd.f32 %v1839, %v1762
    %v1841 = vadd.f32 %v1840, %v1763
    %v1842 = vadd.f32 %v1841, %v1764
    %v1843 = vadd.f32 %v1842, %v1765
    %v1844 = vrot.slane %v1843, 4
    %v1845 = vadd.f32 %v1843, %v1844
    %v1846 = vrot.slane %v1845, 2
    %v1847 = vadd.f32 %v1845, %v1846
    %v1848 = vrot.slane %v1847, 1
    %v1849 = vadd.f32 %v1847, %v1848
    %v1850 = vadd.f32 %v1766, %v1767
    %v1851 = vadd.f32 %v1850, %v1768
    %v1852 = vadd.f32 %v1851, %v1769
    %v1853 = vadd.f32 %v1852, %v1770
    %v1854 = vadd.f32 %v1853, %v1771
    %v1855 = vadd.f32 %v1854, %v1772
    %v1856 = vadd.f32 %v1855, %v1773
    %v1857 = vrot.slane %v1856, 4
    %v1858 = vadd.f32 %v1856, %v1857
    %v1859 = vrot.slane %v1858, 2
    %v1860 = vadd.f32 %v1858, %v1859
    %v1861 = vrot.slane %v1860, 1
    %v1862 = vadd.f32 %v1860, %v1861
    %v1863 = vadd.f32 %v1774, %v1775
    %v1864 = vadd.f32 %v1863, %v1776
    %v1865 = vadd.f32 %v1864, %v1777
    %v1866 = vadd.f32 %v1865, %v1778
    %v1867 = vadd.f32 %v1866, %v1779
    %v1868 = vadd.f32 %v1867, %v1780
    %v1869 = vadd.f32 %v1868, %v1781
    %v1870 = vrot.slane %v1869, 4
    %v1871 = vadd.f32 %v1869, %v1870
    %v1872 = vrot.slane %v1871, 2
    %v1873 = vadd.f32 %v1871, %v1872
    %v1874 = vrot.slane %v1873, 1
    %v1875 = vadd.f32 %v1873, %v1874
    %v1876 = vadd.f32 %v1782, %v1783
    %v1877 = vadd.f32 %v1876, %v1784
    %v1878 = vadd.f32 %v1877, %v1785
    %v1879 = vadd.f32 %v1878, %v1786
    %v1880 = vadd.f32 %v1879, %v1787
    %v1881 = vadd.f32 %v1880, %v1788
    %v1882 = vadd.f32 %v1881, %v1789
    %v1883 = vrot.slane %v1882, 4
    %v1884 = vadd.f32 %v1882, %v1883
    %v1885 = vrot.slane %v1884, 2
    %v1886 = vadd.f32 %v1884, %v1885
    %v1887 = vrot.slane %v1886, 1
    %v1888 = vadd.f32 %v1886, %v1887
    %v1889 = vadd.f32 %v1790, %v1791
    %v1890 = vadd.f32 %v1889, %v1792
    %v1891 = vadd.f32 %v1890, %v1793
    %v1892 = vadd.f32 %v1891, %v1794
    %v1893 = vadd.f32 %v1892, %v1795
    %v1894 = vadd.f32 %v1893, %v1796
    %v1895 = vadd.f32 %v1894, %v1797
    %v1896 = vrot.slane %v1895, 4
    %v1897 = vadd.f32 %v1895, %v1896
    %v1898 = vrot.slane %v1897, 2
    %v1899 = vadd.f32 %v1897, %v1898
    %v1900 = vrot.slane %v1899, 1
    %v1901 = vadd.f32 %v1899, %v1900
    %vm1910 = vcmask 1041409
    %v1911 = vsel %vm1910, %v1823, %v1810
    %vm1912 = vcmask 1042434
    %v1913 = vsel %vm1912, %v1836, %v1911
    %vm1914 = vcmask 1043459
    %v1915 = vsel %vm1914, %v1849, %v1913
    %vm1916 = vcmask 1044484
    %v1917 = vsel %vm1916, %v1862, %v1915
    %vm1918 = vcmask 1045509
    %v1919 = vsel %vm1918, %v1875, %v1917
    %vm1920 = vcmask 1046534
    %v1921 = vsel %vm1920, %v1888, %v1919
    %vm1922 = vcmask 1047559
    %v1923 = vsel %vm1922, %v1901, %v1921
    %1925 = vst [vmem:[#allocation8] sm:$0xff] %v1923
    // Predicated region
    $region34: #{tpu_custom_call.1} parent=1 // pred_check
      _
    $region35: #{tpu_custom_call.1} parent=1 // pred_check_branch
      %1927 = sbr.rel (0) target = $region37
    $region36: #{tpu_custom_call.1} parent=1 // pred_region
      %s1929 = ssub.s32 128, 128
      %1930 = vsyncadd [#allocation4], %s1929
      %s1932 = sshll.u32 [#allocation8], 4
      %s1933 = int_to_ptr.vmem [resolvable:$true] %s1932
      %1935 = dma.vmem_to_hbm [thread:$0]  %s1933, 128, %s5, [#allocation4]
    $region37: #{tpu_custom_call.1} parent=1 // pred_fallthru
      _
    // Predicated region
    $region38: #{tpu_custom_call.1} parent=1 // pred_check
      _
    $region39: #{tpu_custom_call.1} parent=1 // pred_check_branch
      %1937 = sbr.rel (0) target = $region41
    $region40: #{tpu_custom_call.1} parent=1 // pred_region
      %1938 = dma.done [#allocation4], 128
    $region41: #{tpu_custom_call.1} parent=1 // pred_fallthru
      _
    %1939 = vsyncpa [#allocation3], 1
    %1940 = vsyncpa [#allocation6], 1
    %1941 = vsyncpa [#allocation4], 1

</llo_original>
